<compile_context>
chip_gen: v6e
topology: v6e:2x2x1
jax: 0.10.0
libtpu: 0.0.40
codegen_flags: <defaults>
</compile_context>

<pallas_src>
import functools
import math

import jax
import jax.numpy as jnp
from jax.experimental import pallas as pl
from jax.experimental.pallas import tpu as pltpu


def _downsamples_kernel(body_ref, halo_ref, w01_ref, w2_ref, b_ref, g_ref, beta_ref,
                        o_ref, *, tile_h, w_out, c_in, c_out, eps):
    wo1 = w_out + 1
    m = tile_h * wo1

    # Native-dtype loads (no VPU widening pass; MXU accumulates in f32).
    xb = body_ref[...].reshape(tile_h, 2, wo1, 2 * c_in)
    r0 = xb[:, 0]                                   # padded rows 2r     (tile_h, wo1, 2*c_in)
    r1 = xb[:, 1]                                   # padded rows 2r+1
    hl = halo_ref[...].reshape(1, wo1, 2 * c_in)    # padded row 2*tile_h (halo)
    if tile_h > 1:
        # dh=2 rows = dh=0 rows shifted down one output row, plus the halo row.
        # Assembled at the DMA dtype (cheap leading-dim copy).
        r2 = jnp.concatenate([r0[1:], hl], axis=0)
    else:
        r2 = hl
    rows = (r0, r1, r2)

    w01 = w01_ref[...]                              # (3, 2*c_in, c_out)  taps dw=0,1 merged
    w2 = w2_ref[...]                                # (3, c_in,  c_out)   tap  dw=2

    # Full-width matmuls: contiguous LHS views, 6 MXU calls, f32 accumulation.
    acc_w = jnp.zeros((m, c_out), jnp.float32)      # contribution at folded column j
    acc_n = jnp.zeros((m, c_out), jnp.float32)      # contribution at folded column j+1
    for dh in range(3):
        lhs = rows[dh].reshape(m, 2 * c_in)                       # free view
        acc_w = acc_w + jnp.dot(lhs, w01[dh], preferred_element_type=jnp.float32)
        lhs_e = rows[dh][:, :, :c_in].reshape(m, c_in)            # lane-prefix slice (offset 0)
        acc_n = acc_n + jnp.dot(lhs_e, w2[dh], preferred_element_type=jnp.float32)

    acc_w = acc_w.reshape(tile_h, wo1, c_out)
    acc_n = acc_n.reshape(tile_h, wo1, c_out)
    # Single compaction dropping the extra conv column: out[., j] = acc_w[., j] + acc_n[., j+1].
    y = acc_w[:, :w_out, :] + acc_n[:, 1:, :]                     # (tile_h, w_out, c_out)
    y = y.reshape(tile_h * w_out, c_out) + b_ref[...].astype(jnp.float32)

    # LayerNorm over channels (torch nn.LayerNorm: biased variance, eps inside sqrt).
    mu = jnp.mean(y, axis=-1, keepdims=True)
    d = y - mu
    var = jnp.mean(d * d, axis=-1, keepdims=True)
    inv = jax.lax.rsqrt(var + eps)                                # EUP
    out = d * inv * g_ref[...].astype(jnp.float32) + beta_ref[...].astype(jnp.float32)

    # TODO(synk): for Cout < 128 the store is a masked vst; a lane-padded output slab
    # (sliced off outside the kernel) could be faster on v5e at the cost of an extra XLA pass.
    o_ref[...] = out.reshape(1, tile_h * w_out, c_out).astype(o_ref.dtype)


def _vmem_budget():
    """Chip-aware (physical VMEM, scoped-limit) pair."""
    try:
        phys = int(pltpu.get_tpu_info().vmem_capacity_bytes)
    except Exception:
        phys = 64 * 1024 * 1024                       # conservative (v7x per-TC)
    limit = min(phys * 3 // 4, 96 * 1024 * 1024)      # v5e/v6e: 96 MiB, v7x: 48 MiB
    return phys, limit


def _step_bytes(t, w_out, c_in, c_out, itemsize, body_buffers):
    """Per-grid-step working-set estimate (DMA buffers + in-kernel temps)."""
    wo1 = w_out + 1
    body = 2 * t * wo1 * 2 * c_in * itemsize
    halo = wo1 * 2 * c_in * itemsize
    outb = t * w_out * c_out * itemsize
    wts = (6 * c_in * c_out + 3 * c_in * c_out + 3 * c_out) * itemsize
    dma = body_buffers * body + 2 * (halo + outb + wts)
    temps = (t * wo1 * 2 * c_in * itemsize            # r2 assembly at DMA dtype
             + 2 * t * wo1 * c_out * 4                # acc_w / acc_n (f32)
             + 3 * t * w_out * c_out * 4)             # compaction + LN temps (f32)
    return dma + temps


def _choose_tile_h(batch, h_out, w_out, c_in, c_out, itemsize, budget, min_steps=8):
    """Largest row tile (divisor of h_out, sublane-friendly) fitting the VMEM budget,
    shrunk if needed so there are enough grid steps for v7x's two TensorCores."""
    cands = [t for t in range(1, h_out + 1)
             if h_out % t == 0 and ((t * w_out) % 8 == 0 or t == h_out)]
    if not cands:
        cands = [h_out]
    fits = [t for t in cands if _step_bytes(t, w_out, c_in, c_out, itemsize, 3) <= budget]
    pool = fits if fits else cands[:1]
    best = max(pool)
    par = [t for t in pool if batch * (h_out // t) >= min_steps]
    if par:
        best = max(par)
    return best


def downsamples_pallas(x, conv_w, conv_b, ln_gamma, ln_beta, *, eps=1e-5):
    """DownSamples.forward.

    x: (B, Cin, H, W); conv_w: (Cout, Cin, 3, 3); conv_b/ln_gamma/ln_beta: (Cout,)
    Returns ((B, H_out*W_out, Cout), H_out, W_out).
    """
    B, Cin, H, W = x.shape
    Cout = conv_w.shape[0]
    H_out = (H - 1) // 2 + 1
    W_out = (W - 1) // 2 + 1
    Hp = 2 * (H_out + 1)                 # padded rows (>= H+2), even by construction
    Wp = 2 * (W_out + 1)                 # padded cols, even by construction
    wo1 = W_out + 1
    N = H_out * W_out
    itemsize = x.dtype.itemsize

    # One fused layout pass: NCHW -> NHWC + zero border; the reshape folding column parity
    # into the lane axis is a free view (stride-2 column taps become channel halves).
    # TODO(synk): accept NHWC activations upstream (or fuse the transpose into the kernel)
    # to drop this extra HBM round trip of the activations.
    # TODO(synk): for tiny Cin (2*Cin << 128) fold more column pairs into the lane axis so
    # vregs / DMA tiles are lane-dense.
    x_nhwc = jnp.transpose(x, (0, 2, 3, 1))
    x_pad = jnp.pad(x_nhwc, ((0, 0), (1, Hp - H - 1), (1, Wp - W - 1), (0, 0)))
    x_prep = x_pad.reshape(B, Hp, wo1, 2 * Cin)

    # Tap-merged weights: w01[dh] = concat_K(W[dh,0], W[dh,1]); w2[dh] = W[dh,2].
    w_hwio = jnp.transpose(conv_w, (2, 3, 1, 0))            # (3, 3, Cin, Cout)
    w01 = w_hwio[:, 0:2].reshape(3, 2 * Cin, Cout)
    w2 = w_hwio[:, 2]                                       # (3, Cin, Cout)
    b2 = conv_b.reshape(1, Cout)
    g2 = ln_gamma.reshape(1, Cout)
    be2 = ln_beta.reshape(1, Cout)

    phys, default_limit = _vmem_budget()
    budget = default_limit // 3
    tile_h = _choose_tile_h(B, H_out, W_out, Cin, Cout, itemsize, budget)
    n_tiles = H_out // tile_h
    est = _step_bytes(tile_h, W_out, Cin, Cout, itemsize, 3)
    vmem_limit = int(min(phys, max(default_limit, 2 * est)))   # derived from the chosen tile

    kernel = functools.partial(_downsamples_kernel, tile_h=tile_h, w_out=W_out,
                               c_in=Cin, c_out=Cout, eps=float(eps))

    flops = 2 * 9 * Cin * Cout * B * H_out * wo1 + 10 * B * N * Cout
    bytes_accessed = (x_prep.size * itemsize + B * N * Cout * itemsize
                      + (9 * Cin * Cout + 3 * Cout) * 4)

    def run(body_buffers):
        body_block = (1, 2 * tile_h, wo1, 2 * Cin)
        body_idx = lambda b, i: (b, i, 0, 0)
        if body_buffers > 2:
            body_spec = pl.BlockSpec(body_block, body_idx,
                                     pipeline_mode=pl.Buffered(body_buffers))
        else:
            body_spec = pl.BlockSpec(body_block, body_idx)
        out = pl.pallas_call(
            kernel,
            out_shape=jax.ShapeDtypeStruct((B, N, Cout), x.dtype),
            grid_spec=pltpu.PrefetchScalarGridSpec(
                num_scalar_prefetch=0,
                grid=(B, n_tiles),
                in_specs=[
                    body_spec,
                    # Halo: the single padded row just below this tile's body rows.
                    pl.BlockSpec((1, 1, wo1, 2 * Cin),
                                 lambda b, i: (b, (i + 1) * (2 * tile_h), 0, 0)),
                    pl.BlockSpec((3, 2 * Cin, Cout), lambda b, i: (0, 0, 0)),
                    pl.BlockSpec((3, Cin, Cout), lambda b, i: (0, 0, 0)),
                    pl.BlockSpec((1, Cout), lambda b, i: (0, 0)),
                    pl.BlockSpec((1, Cout), lambda b, i: (0, 0)),
                    pl.BlockSpec((1, Cout), lambda b, i: (0, 0)),
                ],
                out_specs=pl.BlockSpec((1, tile_h * W_out, Cout),
                                       lambda b, i: (b, i, 0)),
            ),
            compiler_params=pltpu.CompilerParams(
                dimension_semantics=("parallel", "parallel"),
                vmem_limit_bytes=vmem_limit),
            cost_estimate=pl.CostEstimate(flops=flops, transcendentals=B * N,
                                          bytes_accessed=bytes_accessed),
        )(x_prep, x_prep, w01, w2, b2, g2, be2)
        return jax.block_until_ready(out)

    try:
        out = run(3)        # 3-deep body pipelining: hides DMA behind the short compute
    except Exception:
        out = run(2)        # fall back to default double buffering

    return out, H_out, W_out


def _reference_downsamples(x, conv_w, conv_b, gamma, beta, eps=1e-5):
    """Pure-JAX reference mirroring the PyTorch module."""
    y = jax.lax.conv_general_dilated(
        x, conv_w, window_strides=(2, 2), padding=((1, 1), (1, 1)),
        dimension_numbers=("NCHW", "OIHW", "NCHW"),
        precision=jax.lax.Precision.HIGHEST)
    y = y + conv_b.reshape(1, -1, 1, 1)
    B, C, Ho, Wo = y.shape
    t = jnp.transpose(y.reshape(B, C, Ho * Wo), (0, 2, 1))
    mu = jnp.mean(t, axis=-1, keepdims=True)
    var = jnp.mean((t - mu) ** 2, axis=-1, keepdims=True)
    t = (t - mu) / jnp.sqrt(var + eps) * gamma + beta
    return t, Ho, Wo


if __name__ == "__main__":
    def make_inputs(key, B, Cin, Cout, H, W):
        kx, kw, kb, kg, kbe = jax.random.split(key, 5)
        x = jax.random.normal(kx, (B, Cin, H, W), dtype=jnp.float32)
        fan_out = 3 * 3 * Cout
        conv_w = jax.random.normal(kw, (Cout, Cin, 3, 3), dtype=jnp.float32) * math.sqrt(2.0 / fan_out)
        conv_b = jax.random.normal(kb, (Cout,), dtype=jnp.float32) * 0.05
        gamma = 1.0 + 0.05 * jax.random.normal(kg, (Cout,), dtype=jnp.float32)
        beta = 0.05 * jax.random.normal(kbe, (Cout,), dtype=jnp.float32)
        return x, conv_w, conv_b, gamma, beta

    key = jax.random.PRNGKey(0)
    k1, k2 = jax.random.split(key)

    # Even spatial size (common case).
    x, w, b, g, be = make_inputs(k1, 2, 4, 8, 16, 16)
    out, Ho, Wo = downsamples_pallas(x, w, b, g, be)
    out = jax.block_until_ready(out)
    ref, Ho_r, Wo_r = _reference_downsamples(x, w, b, g, be)
    assert (Ho, Wo) == (Ho_r, Wo_r) == (8, 8)
    assert out.shape == (2, 64, 8)
    err = float(jnp.max(jnp.abs(out - ref)))
    assert err < 2e-2, f"even-size max abs err {err}"

    # Odd spatial size (exercises the zero-border / extra padded row+column path).
    x, w, b, g, be = make_inputs(k2, 1, 3, 16, 15, 15)
    out, Ho, Wo = downsamples_pallas(x, w, b, g, be)
    out = jax.block_until_ready(out)
    ref, Ho_r, Wo_r = _reference_downsamples(x, w, b, g, be)
    assert (Ho, Wo) == (Ho_r, Wo_r) == (8, 8)
    assert out.shape == (1, 64, 16)
    err = float(jnp.max(jnp.abs(out - ref)))
    assert err < 2e-2, f"odd-size max abs err {err}"

    print("KERNEL_OK")
</pallas_src>

<mosaic_0001>
module attributes {stable_mosaic.version = 11 : i64} {
  func.func @_downsamples_kernel(%arg0: i32, %arg1: i32, %arg2: memref<1x4x9x8xf32, #tpu.memory_space<vmem>>, %arg3: memref<1x1x9x8xf32, #tpu.memory_space<vmem>>, %arg4: memref<3x8x8xf32, #tpu.memory_space<vmem>>, %arg5: memref<3x4x8xf32, #tpu.memory_space<vmem>>, %arg6: memref<1x8xf32, #tpu.memory_space<vmem>>, %arg7: memref<1x8xf32, #tpu.memory_space<vmem>>, %arg8: memref<1x8xf32, #tpu.memory_space<vmem>>, %arg9: memref<1x16x8xf32, #tpu.memory_space<vmem>>) attributes {dimension_semantics = [#tpu.dimension_semantics<parallel>, #tpu.dimension_semantics<parallel>], iteration_bounds = array<i64: 2, 4>, scalar_prefetch = 0 : i64, scratch_operands = 0 : i64, tpu.core_type = #tpu.core_type<tc>, window_params = [{transform_indices = @transform_0, window_bounds = array<i64: 1, 4, 9, 8>}, {transform_indices = @transform_1, window_bounds = array<i64: 1, 1, 9, 8>}, {pipeline_mode = #tpu.pipeline_mode<synchronous>, transform_indices = @transform_2, window_bounds = array<i64: 3, 8, 8>}, {pipeline_mode = #tpu.pipeline_mode<synchronous>, transform_indices = @transform_3, window_bounds = array<i64: 3, 4, 8>}, {pipeline_mode = #tpu.pipeline_mode<synchronous>, transform_indices = @transform_4, window_bounds = array<i64: 1, 8>}, {pipeline_mode = #tpu.pipeline_mode<synchronous>, transform_indices = @transform_5, window_bounds = array<i64: 1, 8>}, {pipeline_mode = #tpu.pipeline_mode<synchronous>, transform_indices = @transform_6, window_bounds = array<i64: 1, 8>}, {transform_indices = @transform_7, window_bounds = array<i64: 1, 16, 8>}]} {
    %c0 = arith.constant 0 : index
    %c0_0 = arith.constant 0 : index
    %c0_1 = arith.constant 0 : index
    %c0_2 = arith.constant 0 : index
    %0 = vector.load %arg2[%c0, %c0_0, %c0_1, %c0_2] : memref<1x4x9x8xf32, #tpu.memory_space<vmem>>, vector<1x4x9x8xf32>
    %1 = vector.shape_cast %0 : vector<1x4x9x8xf32> to vector<2x2x9x8xf32>
    %2 = vector.extract_strided_slice %1 {offsets = [0, 0, 0, 0], sizes = [2, 1, 9, 8], strides = [1, 1, 1, 1]} : vector<2x2x9x8xf32> to vector<2x1x9x8xf32>
    %3 = vector.shape_cast %2 : vector<2x1x9x8xf32> to vector<2x9x8xf32>
    %4 = vector.extract_strided_slice %1 {offsets = [0, 1, 0, 0], sizes = [2, 1, 9, 8], strides = [1, 1, 1, 1]} : vector<2x2x9x8xf32> to vector<2x1x9x8xf32>
    %5 = vector.shape_cast %4 : vector<2x1x9x8xf32> to vector<2x9x8xf32>
    %c0_3 = arith.constant 0 : index
    %c0_4 = arith.constant 0 : index
    %c0_5 = arith.constant 0 : index
    %c0_6 = arith.constant 0 : index
    %6 = vector.load %arg3[%c0_3, %c0_4, %c0_5, %c0_6] : memref<1x1x9x8xf32, #tpu.memory_space<vmem>>, vector<1x1x9x8xf32>
    %7 = vector.shape_cast %6 : vector<1x1x9x8xf32> to vector<1x9x8xf32>
    %8 = vector.extract_strided_slice %3 {offsets = [1, 0, 0], sizes = [1, 9, 8], strides = [1, 1, 1]} : vector<2x9x8xf32> to vector<1x9x8xf32>
    %9 = tpu.concatenate %8, %7 in 0 : vector<1x9x8xf32>, vector<1x9x8xf32> -> vector<2x9x8xf32>
    %c0_7 = arith.constant 0 : index
    %c0_8 = arith.constant 0 : index
    %c0_9 = arith.constant 0 : index
    %10 = vector.load %arg4[%c0_7, %c0_8, %c0_9] : memref<3x8x8xf32, #tpu.memory_space<vmem>>, vector<3x8x8xf32>
    %c0_10 = arith.constant 0 : index
    %c0_11 = arith.constant 0 : index
    %c0_12 = arith.constant 0 : index
    %11 = vector.load %arg5[%c0_10, %c0_11, %c0_12] : memref<3x4x8xf32, #tpu.memory_space<vmem>>, vector<3x4x8xf32>
    %cst = arith.constant 0.000000e+00 : f32
    %12 = vector.broadcast %cst : f32 to vector<18x8xf32>
    %cst_13 = arith.constant 0.000000e+00 : f32
    %13 = vector.broadcast %cst_13 : f32 to vector<18x8xf32>
    %14 = vector.shape_cast %3 : vector<2x9x8xf32> to vector<18x8xf32>
    %15 = vector.extract_strided_slice %10 {offsets = [0, 0, 0], sizes = [1, 8, 8], strides = [1, 1, 1]} : vector<3x8x8xf32> to vector<1x8x8xf32>
    %16 = vector.shape_cast %15 : vector<1x8x8xf32> to vector<8x8xf32>
    %cst_14 = arith.constant dense<0.000000e+00> : vector<18x8xf32>
    %17 = tpu.matmul %14, %16, %cst_14 {dimension_numbers = #tpu.dot_dimension_numbers<[1], [0], [0], [1], [0, 0, 1, 1], [], []>} : vector<18x8xf32>, vector<8x8xf32>, vector<18x8xf32> -> vector<18x8xf32>
    %18 = arith.addf %12, %17 : vector<18x8xf32>
    %19 = vector.extract_strided_slice %3 {offsets = [0, 0, 0], sizes = [2, 9, 4], strides = [1, 1, 1]} : vector<2x9x8xf32> to vector<2x9x4xf32>
    %20 = vector.shape_cast %19 : vector<2x9x4xf32> to vector<18x4xf32>
    %21 = vector.extract_strided_slice %11 {offsets = [0, 0, 0], sizes = [1, 4, 8], strides = [1, 1, 1]} : vector<3x4x8xf32> to vector<1x4x8xf32>
    %22 = vector.shape_cast %21 : vector<1x4x8xf32> to vector<4x8xf32>
    %cst_15 = arith.constant dense<0.000000e+00> : vector<18x8xf32>
    %23 = tpu.matmul %20, %22, %cst_15 {dimension_numbers = #tpu.dot_dimension_numbers<[1], [0], [0], [1], [0, 0, 1, 1], [], []>} : vector<18x4xf32>, vector<4x8xf32>, vector<18x8xf32> -> vector<18x8xf32>
    %24 = arith.addf %13, %23 : vector<18x8xf32>
    %25 = vector.shape_cast %5 : vector<2x9x8xf32> to vector<18x8xf32>
    %26 = vector.extract_strided_slice %10 {offsets = [1, 0, 0], sizes = [1, 8, 8], strides = [1, 1, 1]} : vector<3x8x8xf32> to vector<1x8x8xf32>
    %27 = vector.shape_cast %26 : vector<1x8x8xf32> to vector<8x8xf32>
    %cst_16 = arith.constant dense<0.000000e+00> : vector<18x8xf32>
    %28 = tpu.matmul %25, %27, %cst_16 {dimension_numbers = #tpu.dot_dimension_numbers<[1], [0], [0], [1], [0, 0, 1, 1], [], []>} : vector<18x8xf32>, vector<8x8xf32>, vector<18x8xf32> -> vector<18x8xf32>
    %29 = arith.addf %18, %28 : vector<18x8xf32>
    %30 = vector.extract_strided_slice %5 {offsets = [0, 0, 0], sizes = [2, 9, 4], strides = [1, 1, 1]} : vector<2x9x8xf32> to vector<2x9x4xf32>
    %31 = vector.shape_cast %30 : vector<2x9x4xf32> to vector<18x4xf32>
    %32 = vector.extract_strided_slice %11 {offsets = [1, 0, 0], sizes = [1, 4, 8], strides = [1, 1, 1]} : vector<3x4x8xf32> to vector<1x4x8xf32>
    %33 = vector.shape_cast %32 : vector<1x4x8xf32> to vector<4x8xf32>
    %cst_17 = arith.constant dense<0.000000e+00> : vector<18x8xf32>
    %34 = tpu.matmul %31, %33, %cst_17 {dimension_numbers = #tpu.dot_dimension_numbers<[1], [0], [0], [1], [0, 0, 1, 1], [], []>} : vector<18x4xf32>, vector<4x8xf32>, vector<18x8xf32> -> vector<18x8xf32>
    %35 = arith.addf %24, %34 : vector<18x8xf32>
    %36 = vector.shape_cast %9 : vector<2x9x8xf32> to vector<18x8xf32>
    %37 = vector.extract_strided_slice %10 {offsets = [2, 0, 0], sizes = [1, 8, 8], strides = [1, 1, 1]} : vector<3x8x8xf32> to vector<1x8x8xf32>
    %38 = vector.shape_cast %37 : vector<1x8x8xf32> to vector<8x8xf32>
    %cst_18 = arith.constant dense<0.000000e+00> : vector<18x8xf32>
    %39 = tpu.matmul %36, %38, %cst_18 {dimension_numbers = #tpu.dot_dimension_numbers<[1], [0], [0], [1], [0, 0, 1, 1], [], []>} : vector<18x8xf32>, vector<8x8xf32>, vector<18x8xf32> -> vector<18x8xf32>
    %40 = arith.addf %29, %39 : vector<18x8xf32>
    %41 = vector.extract_strided_slice %9 {offsets = [0, 0, 0], sizes = [2, 9, 4], strides = [1, 1, 1]} : vector<2x9x8xf32> to vector<2x9x4xf32>
    %42 = vector.shape_cast %41 : vector<2x9x4xf32> to vector<18x4xf32>
    %43 = vector.extract_strided_slice %11 {offsets = [2, 0, 0], sizes = [1, 4, 8], strides = [1, 1, 1]} : vector<3x4x8xf32> to vector<1x4x8xf32>
    %44 = vector.shape_cast %43 : vector<1x4x8xf32> to vector<4x8xf32>
    %cst_19 = arith.constant dense<0.000000e+00> : vector<18x8xf32>
    %45 = tpu.matmul %42, %44, %cst_19 {dimension_numbers = #tpu.dot_dimension_numbers<[1], [0], [0], [1], [0, 0, 1, 1], [], []>} : vector<18x4xf32>, vector<4x8xf32>, vector<18x8xf32> -> vector<18x8xf32>
    %46 = arith.addf %35, %45 : vector<18x8xf32>
    %47 = vector.shape_cast %40 : vector<18x8xf32> to vector<2x9x8xf32>
    %48 = vector.shape_cast %46 : vector<18x8xf32> to vector<2x9x8xf32>
    %49 = vector.extract_strided_slice %47 {offsets = [0, 0, 0], sizes = [2, 8, 8], strides = [1, 1, 1]} : vector<2x9x8xf32> to vector<2x8x8xf32>
    %50 = vector.extract_strided_slice %48 {offsets = [0, 1, 0], sizes = [2, 8, 8], strides = [1, 1, 1]} : vector<2x9x8xf32> to vector<2x8x8xf32>
    %51 = arith.addf %49, %50 : vector<2x8x8xf32>
    %52 = vector.shape_cast %51 : vector<2x8x8xf32> to vector<16x8xf32>
    %c0_20 = arith.constant 0 : index
    %c0_21 = arith.constant 0 : index
    %53 = vector.load %arg6[%c0_20, %c0_21] : memref<1x8xf32, #tpu.memory_space<vmem>>, vector<1x8xf32>
    %54 = vector.broadcast %53 : vector<1x8xf32> to vector<16x8xf32>
    %55 = arith.addf %52, %54 : vector<16x8xf32>
    %cst_22 = arith.constant dense<0.000000e+00> : vector<16xf32>
    %56 = vector.multi_reduction <add>, %55, %cst_22 [1] : vector<16x8xf32> to vector<16xf32>
    %57 = vector.shape_cast %56 : vector<16xf32> to vector<16x1xf32>
    %cst_23 = arith.constant 8.000000e+00 : f32
    %58 = vector.broadcast %cst_23 : f32 to vector<16x1xf32>
    %59 = arith.divf %57, %58 : vector<16x1xf32>
    %60 = vector.broadcast %59 : vector<16x1xf32> to vector<16x8xf32>
    %61 = arith.subf %55, %60 : vector<16x8xf32>
    %62 = arith.mulf %61, %61 : vector<16x8xf32>
    %cst_24 = arith.constant dense<0.000000e+00> : vector<16xf32>
    %63 = vector.multi_reduction <add>, %62, %cst_24 [1] : vector<16x8xf32> to vector<16xf32>
    %64 = vector.shape_cast %63 : vector<16xf32> to vector<16x1xf32>
    %cst_25 = arith.constant 8.000000e+00 : f32
    %65 = vector.broadcast %cst_25 : f32 to vector<16x1xf32>
    %66 = arith.divf %64, %65 : vector<16x1xf32>
    %cst_26 = arith.constant 9.99999974E-6 : f32
    %67 = vector.broadcast %cst_26 : f32 to vector<16x1xf32>
    %68 = arith.addf %66, %67 : vector<16x1xf32>
    %69 = math.rsqrt %68 : vector<16x1xf32>
    %70 = vector.broadcast %69 : vector<16x1xf32> to vector<16x8xf32>
    %71 = arith.mulf %61, %70 : vector<16x8xf32>
    %c0_27 = arith.constant 0 : index
    %c0_28 = arith.constant 0 : index
    %72 = vector.load %arg7[%c0_27, %c0_28] : memref<1x8xf32, #tpu.memory_space<vmem>>, vector<1x8xf32>
    %73 = vector.broadcast %72 : vector<1x8xf32> to vector<16x8xf32>
    %74 = arith.mulf %71, %73 : vector<16x8xf32>
    %c0_29 = arith.constant 0 : index
    %c0_30 = arith.constant 0 : index
    %75 = vector.load %arg8[%c0_29, %c0_30] : memref<1x8xf32, #tpu.memory_space<vmem>>, vector<1x8xf32>
    %76 = vector.broadcast %75 : vector<1x8xf32> to vector<16x8xf32>
    %77 = arith.addf %74, %76 : vector<16x8xf32>
    %78 = vector.shape_cast %77 : vector<16x8xf32> to vector<1x16x8xf32>
    %c0_31 = arith.constant 0 : index
    %c0_32 = arith.constant 0 : index
    %c0_33 = arith.constant 0 : index
    %79 = vector.load %arg9[%c0_31, %c0_32, %c0_33] : memref<1x16x8xf32, #tpu.memory_space<vmem>>, vector<1x16x8xf32>
    tpu.vector_store %arg9[%c0_31, %c0_32, %c0_33], %78 {strides = array<i32>} : memref<1x16x8xf32, #tpu.memory_space<vmem>>, vector<1x16x8xf32>,
    return
  }
  func.func @transform_0(%arg0: i32, %arg1: i32) -> (i32, i32, i32, i32) {
    %c0_i32 = arith.constant 0 : i32
    %c0_i32_0 = arith.constant 0 : i32
    %c0_i32_1 = arith.constant 0 : i32
    return %arg0, %arg1, %c0_i32, %c0_i32_0 : i32, i32, i32, i32
  }
  func.func @transform_1(%arg0: i32, %arg1: i32) -> (i32, i32, i32, i32) {
    %c1_i32 = arith.constant 1 : i32
    %0 = arith.addi %arg1, %c1_i32 : i32
    %c4_i32 = arith.constant 4 : i32
    %1 = arith.muli %0, %c4_i32 : i32
    %c0_i32 = arith.constant 0 : i32
    %c0_i32_0 = arith.constant 0 : i32
    %c0_i32_1 = arith.constant 0 : i32
    return %arg0, %1, %c0_i32, %c0_i32_0 : i32, i32, i32, i32
  }
  func.func @transform_2(%arg0: i32, %arg1: i32) -> (i32, i32, i32) {
    %c0_i32 = arith.constant 0 : i32
    %c0_i32_0 = arith.constant 0 : i32
    %c0_i32_1 = arith.constant 0 : i32
    %c0_i32_2 = arith.constant 0 : i32
    return %c0_i32, %c0_i32_0, %c0_i32_1 : i32, i32, i32
  }
  func.func @transform_3(%arg0: i32, %arg1: i32) -> (i32, i32, i32) {
    %c0_i32 = arith.constant 0 : i32
    %c0_i32_0 = arith.constant 0 : i32
    %c0_i32_1 = arith.constant 0 : i32
    %c0_i32_2 = arith.constant 0 : i32
    return %c0_i32, %c0_i32_0, %c0_i32_1 : i32, i32, i32
  }
  func.func @transform_4(%arg0: i32, %arg1: i32) -> (i32, i32) {
    %c0_i32 = arith.constant 0 : i32
    %c0_i32_0 = arith.constant 0 : i32
    %c0_i32_1 = arith.constant 0 : i32
    return %c0_i32, %c0_i32_0 : i32, i32
  }
  func.func @transform_5(%arg0: i32, %arg1: i32) -> (i32, i32) {
    %c0_i32 = arith.constant 0 : i32
    %c0_i32_0 = arith.constant 0 : i32
    %c0_i32_1 = arith.constant 0 : i32
    return %c0_i32, %c0_i32_0 : i32, i32
  }
  func.func @transform_6(%arg0: i32, %arg1: i32) -> (i32, i32) {
    %c0_i32 = arith.constant 0 : i32
    %c0_i32_0 = arith.constant 0 : i32
    %c0_i32_1 = arith.constant 0 : i32
    return %c0_i32, %c0_i32_0 : i32, i32
  }
  func.func @transform_7(%arg0: i32, %arg1: i32) -> (i32, i32, i32) {
    %c0_i32 = arith.constant 0 : i32
    %c0_i32_0 = arith.constant 0 : i32
    return %arg0, %arg1, %c0_i32 : i32, i32, i32
  }
}

</mosaic_0001>

<llo_original>
// kernel: tpu_custom_call.1
$region0: #{tpu_custom_call.1}
  #allocation0 [shape = 'u32[]', space=smem, size = 0x4, offset = 0x4, fixed_abs, tag = 'smem constant byte address 0x4 - core index']
  #allocation1 [shape = 'u32[144,128]{1,0:T(1,128)}', space=vmem, size = 0x12000, scoped, tag = 'internal scratch']
  %s0 = inlined_call_operand.vmem [shape: f32[2,18,9,8], index: 0, kind: input, shape index: {}]
  %s1 = inlined_call_operand.vmem [shape: f32[2,18,9,8], index: 1, kind: input, shape index: {}]
  %s2 = inlined_call_operand.vmem [shape: f32[3,8,8], index: 2, kind: input, shape index: {}]
  %s3 = inlined_call_operand.vmem [shape: f32[3,4,8], index: 3, kind: input, shape index: {}]
  %s4 = inlined_call_operand.vmem [shape: f32[1,8], index: 4, kind: input, shape index: {}]
  %s5 = inlined_call_operand.vmem [shape: f32[1,8], index: 5, kind: input, shape index: {}]
  %s6 = inlined_call_operand.vmem [shape: f32[1,8], index: 6, kind: input, shape index: {}]
  %s7 = inlined_call_operand.vmem [shape: f32[2,64,8], index: 7, kind: output, shape index: {}]
  %s8 = sld [smem:[#allocation0]]
  $region61: #{tpu_custom_call.1} parent=0
    _
  %s10 = ssub.s32 1, %s8
  %s11 = scalar_select 0, %s10, %s8
  loop: start=0, step=1, limit=10
  $region2: #{tpu_custom_call.1} parent=0 // loop_pre_header
    _
  $region3: #{tpu_custom_call.1} parent=0 // loop_header
    %s13 = sphi 0, %s17
    %p14 = scmp.ge.s32.totalorder %s13, 10
    %s20 = sphi 0, %s32
    %s21 = sphi 0, %s28
    %s22 = sphi 0, %s20
    %s23 = sphi 0, %s21
    %s24 = sphi 0, %s22
    %s25 = sphi 0, %s23
    %s37 = sphi 0, %s39
    %s40 = sphi 0, %s37
    %s41 = sphi 0, %s40
    %s57 = sphi 0, %s41
    %s69 = sphi 0, %s71
    %s72 = sphi 0, %s69
    %s73 = sphi 0, %s72
    %s89 = sphi 0, %s73
    %s93 = sphi 0, %s93
    %s95 = sphi 0, %s93
    %s96 = sphi 0, %s95
    %s110 = sphi 0, %s96
    %s114 = sphi 0, %s114
    %s116 = sphi 0, %s114
    %s117 = sphi 0, %s116
    %s131 = sphi 0, %s117
    %s135 = sphi 0, %s135
    %s137 = sphi 0, %s135
    %s138 = sphi 0, %s137
    %s152 = sphi 0, %s138
    %s156 = sphi 0, %s156
    %s158 = sphi 0, %s156
    %s159 = sphi 0, %s158
    %s173 = sphi 0, %s159
    %s177 = sphi 0, %s177
    %s179 = sphi 0, %s177
    %s180 = sphi 0, %s179
    %s194 = sphi 0, %s180
    %s202 = sphi 0, %s204
    %s205 = sphi 0, %s202
    %s206 = sphi 0, %s205
    %s222 = sphi 0, %s206
  $region4: #{tpu_custom_call.1} parent=0 // loop_header_branch
    %16 = sbr.rel (%p14) target = $region8
  $region5: #{tpu_custom_call.1} parent=0 // loop_body
    %s18 = ssub.s32 %s13, 1
    %s19 = ssub.s32 %s13, 2
    %s26 = sadd.s32 1, %s21
    %p27 = scmp.ge.s32.totalorder %s26, 4
    %s28 = scalar_select %p27, 0, %s26
    %s29 = sadd.s32 1, %s20
    %s30 = scalar_select %p27, %s29, %s20
    %p31 = scmp.ge.s32.totalorder %s30, 2
    %s32 = scalar_select %p31, 0, %s30
    %s33 = ssub.s32 %s20, %s32
    %s34 = ssub.s32 %s21, %s28
    %s35 = sor.u32 %s33, %s34
    %p36 = scmp.eq.s32.totalorder %s35, 0
    %s38 = sadd.s32 %s37, 1
    %s39 = scalar_select %p36, %s37, %s38
    %p42 = pneg %p36
    %p43 = scmp.eq.s32.totalorder %s13, 7
    %p44 = por %p42, %p43
    %p45 = scmp.ne.s32.totalorder %s37, %s40
    %p46 = scmp.eq.s32.totalorder %s13, 0
    %p47 = por %p45, %p46
    %p48 = scmp.ne.s32.totalorder %s37, %s40
    %p49 = scmp.eq.s32.totalorder %s18, 7
    %p50 = por %p48, %p49
    %p51 = scmp.ne.s32.totalorder %s40, %s41
    %p52 = scmp.eq.s32.totalorder %s18, 0
    %p53 = por %p51, %p52
    %p54 = scmp.ne.s32.totalorder %s40, %s41
    %p55 = scmp.eq.s32.totalorder %s19, 7
    %p56 = por %p54, %p55
    %p58 = scmp.ne.s32.totalorder %s41, %s57
    %p59 = scmp.eq.s32.totalorder %s19, 0
    %p60 = por %p58, %p59
    %s61 = sadd.s32 %s21, 1
    %s62 = smul.u32 %s61, 4
    %s63 = sadd.s32 %s28, 1
    %s64 = smul.u32 %s63, 4
    %s65 = ssub.s32 %s20, %s32
    %s66 = ssub.s32 %s62, %s64
    %s67 = sor.u32 %s65, %s66
    %p68 = scmp.eq.s32.totalorder %s67, 0
    %s70 = sadd.s32 %s69, 1
    %s71 = scalar_select %p68, %s69, %s70
    %p74 = pneg %p68
    %p75 = scmp.eq.s32.totalorder %s13, 7
    %p76 = por %p74, %p75
    %p77 = scmp.ne.s32.totalorder %s69, %s72
    %p78 = scmp.eq.s32.totalorder %s13, 0
    %p79 = por %p77, %p78
    %p80 = scmp.ne.s32.totalorder %s69, %s72
    %p81 = scmp.eq.s32.totalorder %s18, 7
    %p82 = por %p80, %p81
    %p83 = scmp.ne.s32.totalorder %s72, %s73
    %p84 = scmp.eq.s32.totalorder %s18, 0
    %p85 = por %p83, %p84
    %p86 = scmp.ne.s32.totalorder %s72, %s73
    %p87 = scmp.eq.s32.totalorder %s19, 7
    %p88 = por %p86, %p87
    %p90 = scmp.ne.s32.totalorder %s73, %s89
    %p91 = scmp.eq.s32.totalorder %s19, 0
    %p92 = por %p90, %p91
    %s94 = sadd.s32 %s93, 1
    %p97 = scmp.eq.s32.totalorder %s13, 7
    %p98 = scmp.ne.s32.totalorder %s93, %s95
    %p99 = scmp.eq.s32.totalorder %s13, 0
    %p100 = por %p98, %p99
    %p101 = scmp.ne.s32.totalorder %s93, %s95
    %p102 = scmp.eq.s32.totalorder %s18, 7
    %p103 = por %p101, %p102
    %p104 = scmp.ne.s32.totalorder %s95, %s96
    %p105 = scmp.eq.s32.totalorder %s18, 0
    %p106 = por %p104, %p105
    %p107 = scmp.ne.s32.totalorder %s95, %s96
    %p108 = scmp.eq.s32.totalorder %s19, 7
    %p109 = por %p107, %p108
    %p111 = scmp.ne.s32.totalorder %s96, %s110
    %p112 = scmp.eq.s32.totalorder %s19, 0
    %p113 = por %p111, %p112
    %s115 = sadd.s32 %s114, 1
    %p118 = scmp.eq.s32.totalorder %s13, 7
    %p119 = scmp.ne.s32.totalorder %s114, %s116
    %p120 = scmp.eq.s32.totalorder %s13, 0
    %p121 = por %p119, %p120
    %p122 = scmp.ne.s32.totalorder %s114, %s116
    %p123 = scmp.eq.s32.totalorder %s18, 7
    %p124 = por %p122, %p123
    %p125 = scmp.ne.s32.totalorder %s116, %s117
    %p126 = scmp.eq.s32.totalorder %s18, 0
    %p127 = por %p125, %p126
    %p128 = scmp.ne.s32.totalorder %s116, %s117
    %p129 = scmp.eq.s32.totalorder %s19, 7
    %p130 = por %p128, %p129
    %p132 = scmp.ne.s32.totalorder %s117, %s131
    %p133 = scmp.eq.s32.totalorder %s19, 0
    %p134 = por %p132, %p133
    %s136 = sadd.s32 %s135, 1
    %p139 = scmp.eq.s32.totalorder %s13, 7
    %p140 = scmp.ne.s32.totalorder %s135, %s137
    %p141 = scmp.eq.s32.totalorder %s13, 0
    %p142 = por %p140, %p141
    %p143 = scmp.ne.s32.totalorder %s135, %s137
    %p144 = scmp.eq.s32.totalorder %s18, 7
    %p145 = por %p143, %p144
    %p146 = scmp.ne.s32.totalorder %s137, %s138
    %p147 = scmp.eq.s32.totalorder %s18, 0
    %p148 = por %p146, %p147
    %p149 = scmp.ne.s32.totalorder %s137, %s138
    %p150 = scmp.eq.s32.totalorder %s19, 7
    %p151 = por %p149, %p150
    %p153 = scmp.ne.s32.totalorder %s138, %s152
    %p154 = scmp.eq.s32.totalorder %s19, 0
    %p155 = por %p153, %p154
    %s157 = sadd.s32 %s156, 1
    %p160 = scmp.eq.s32.totalorder %s13, 7
    %p161 = scmp.ne.s32.totalorder %s156, %s158
    %p162 = scmp.eq.s32.totalorder %s13, 0
    %p163 = por %p161, %p162
    %p164 = scmp.ne.s32.totalorder %s156, %s158
    %p165 = scmp.eq.s32.totalorder %s18, 7
    %p166 = por %p164, %p165
    %p167 = scmp.ne.s32.totalorder %s158, %s159
    %p168 = scmp.eq.s32.totalorder %s18, 0
    %p169 = por %p167, %p168
    %p170 = scmp.ne.s32.totalorder %s158, %s159
    %p171 = scmp.eq.s32.totalorder %s19, 7
    %p172 = por %p170, %p171
    %p174 = scmp.ne.s32.totalorder %s159, %s173
    %p175 = scmp.eq.s32.totalorder %s19, 0
    %p176 = por %p174, %p175
    %s178 = sadd.s32 %s177, 1
    %p181 = scmp.eq.s32.totalorder %s13, 7
    %p182 = scmp.ne.s32.totalorder %s177, %s179
    %p183 = scmp.eq.s32.totalorder %s13, 0
    %p184 = por %p182, %p183
    %p185 = scmp.ne.s32.totalorder %s177, %s179
    %p186 = scmp.eq.s32.totalorder %s18, 7
    %p187 = por %p185, %p186
    %p188 = scmp.ne.s32.totalorder %s179, %s180
    %p189 = scmp.eq.s32.totalorder %s18, 0
    %p190 = por %p188, %p189
    %p191 = scmp.ne.s32.totalorder %s179, %s180
    %p192 = scmp.eq.s32.totalorder %s19, 7
    %p193 = por %p191, %p192
    %p195 = scmp.ne.s32.totalorder %s180, %s194
    %p196 = scmp.eq.s32.totalorder %s19, 0
    %p197 = por %p195, %p196
    %s198 = ssub.s32 %s20, %s32
    %s199 = ssub.s32 %s21, %s28
    %s200 = sor.u32 %s198, %s199
    %p201 = scmp.eq.s32.totalorder %s200, 0
    %s203 = sadd.s32 %s202, 1
    %s204 = scalar_select %p201, %s202, %s203
    %p207 = pneg %p201
    %p208 = scmp.eq.s32.totalorder %s13, 7
    %p209 = por %p207, %p208
    %p210 = scmp.ne.s32.totalorder %s202, %s205
    %p211 = scmp.eq.s32.totalorder %s13, 0
    %p212 = por %p210, %p211
    %p213 = scmp.ne.s32.totalorder %s202, %s205
    %p214 = scmp.eq.s32.totalorder %s18, 7
    %p215 = por %p213, %p214
    %p216 = scmp.ne.s32.totalorder %s205, %s206
    %p217 = scmp.eq.s32.totalorder %s18, 0
    %p218 = por %p216, %p217
    %p219 = scmp.ne.s32.totalorder %s205, %s206
    %p220 = scmp.eq.s32.totalorder %s19, 7
    %p221 = por %p219, %p220
    %p223 = scmp.ne.s32.totalorder %s206, %s222
    %p224 = scmp.eq.s32.totalorder %s19, 0
    %p225 = por %p223, %p224
    %p226 = scmp.le.s32.totalorder 1, %s13
    %p227 = scmp.lt.s32.totalorder %s13, 9
    %p228 = pnand %p226, %p227
    %p229 = pneg %p228
    // Predicated region
    $region9: #{tpu_custom_call.1} parent=5 // pred_check
      _
    $region10: #{tpu_custom_call.1} parent=5 // pred_check_branch
      %231 = sbr.rel (%p228) target = $region12
    $region11: #{tpu_custom_call.1} parent=5 // pred_region
      %s232 = ssub.s32 %s13, 1
      // Predicated region
      $region13: #{tpu_custom_call.1} parent=11 // pred_check
        %p233 = pneg %p106
      $region14: #{tpu_custom_call.1} parent=11 // pred_check_branch
        %235 = sbr.rel (%p233) target = $region16
      $region15: #{tpu_custom_call.1} parent=11 // pred_region
        _
      $region16: #{tpu_custom_call.1} parent=11 // pred_fallthru
        _
      // Predicated region
      $region17: #{tpu_custom_call.1} parent=11 // pred_check
        %p236 = pneg %p127
      $region18: #{tpu_custom_call.1} parent=11 // pred_check_branch
        %238 = sbr.rel (%p236) target = $region20
      $region19: #{tpu_custom_call.1} parent=11 // pred_region
        _
      $region20: #{tpu_custom_call.1} parent=11 // pred_fallthru
        _
      // Predicated region
      $region21: #{tpu_custom_call.1} parent=11 // pred_check
        %p239 = pneg %p148
      $region22: #{tpu_custom_call.1} parent=11 // pred_check_branch
        %241 = sbr.rel (%p239) target = $region24
      $region23: #{tpu_custom_call.1} parent=11 // pred_region
        _
      $region24: #{tpu_custom_call.1} parent=11 // pred_fallthru
        _
      // Predicated region
      $region25: #{tpu_custom_call.1} parent=11 // pred_check
        %p242 = pneg %p169
      $region26: #{tpu_custom_call.1} parent=11 // pred_check_branch
        %244 = sbr.rel (%p242) target = $region28
      $region27: #{tpu_custom_call.1} parent=11 // pred_region
        _
      $region28: #{tpu_custom_call.1} parent=11 // pred_fallthru
        _
      // Predicated region
      $region29: #{tpu_custom_call.1} parent=11 // pred_check
        %p245 = pneg %p190
      $region30: #{tpu_custom_call.1} parent=11 // pred_check_branch
        %247 = sbr.rel (%p245) target = $region32
      $region31: #{tpu_custom_call.1} parent=11 // pred_region
        _
      $region32: #{tpu_custom_call.1} parent=11 // pred_fallthru
        _
    $region12: #{tpu_custom_call.1} parent=5 // pred_fallthru
      _
    %p248 = scmp.lt.s32.totalorder %s13, 8
    // Predicated region
    $region33: #{tpu_custom_call.1} parent=5 // pred_check
      %p249 = pneg %p248
    $region34: #{tpu_custom_call.1} parent=5 // pred_check_branch
      %251 = sbr.rel (%p249) target = $region36
    $region35: #{tpu_custom_call.1} parent=5 // pred_region
      // Predicated region
      $region37: #{tpu_custom_call.1} parent=35 // pred_check
        %p252 = pneg %p47
      $region38: #{tpu_custom_call.1} parent=35 // pred_check_branch
        %254 = sbr.rel (%p252) target = $region40
      $region39: #{tpu_custom_call.1} parent=35 // pred_region
        %s255 = smul.u32 4, %s21
        %s256 = ssub.s32 18, %s255
        %p257 = scmp.lt.s32.totalorder %s256, 4
        %s258 = scalar_select %p257, %s256, 4
        %s259 = smul.u32 128, %s258
        %s260 = smul.u32 %s259, 2
        %p261 = scmp.lt.s32.totalorder %s20, 1
        %s262 = scalar_select %p261, %s20, 1
        %p263 = scmp.lt.s32.totalorder %s255, 17
        %s264 = scalar_select %p263, %s255, 17
        %s265 = smul.addr %s264, 2
        %s266 = smul.addr %s262, 36
        %s267 = sadd.s32 %s265, %s266
        %s268 = smul.addr %s267, 8
        %s269 = scalar_lea.vmem %s0, %s268
        %s270 = smul.u32 4, %s21
        %s271 = ssub.s32 18, %s270
        %p272 = scmp.lt.s32.totalorder %s271, 4
        %s273 = scalar_select %p272, %s271, 4
        %s274 = smul.u32 128, %s273
        %s275 = smul.u32 %s274, 2
      $region40: #{tpu_custom_call.1} parent=35 // pred_fallthru
        _
      // Predicated region
      $region41: #{tpu_custom_call.1} parent=35 // pred_check
        %p276 = pneg %p79
      $region42: #{tpu_custom_call.1} parent=35 // pred_check_branch
        %278 = sbr.rel (%p276) target = $region44
      $region43: #{tpu_custom_call.1} parent=35 // pred_region
        %s279 = sadd.s32 %s21, 1
        %s280 = smul.u32 %s279, 4
        %p281 = scmp.lt.s32.totalorder %s20, 1
        %s282 = scalar_select %p281, %s20, 1
        %p283 = scmp.lt.s32.totalorder %s280, 17
        %s284 = scalar_select %p283, %s280, 17
        %s285 = smul.addr %s284, 2
        %s286 = smul.addr %s282, 36
        %s287 = sadd.s32 %s285, %s286
        %s288 = smul.addr %s287, 8
        %s289 = scalar_lea.vmem %s1, %s288
        %s290 = sadd.s32 %s21, 1
        %s291 = smul.u32 %s290, 4
      $region44: #{tpu_custom_call.1} parent=35 // pred_fallthru
        _
    $region36: #{tpu_custom_call.1} parent=5 // pred_fallthru
      _
    %p292 = scmp.le.s32.totalorder 1, %s13
    %p293 = scmp.lt.s32.totalorder %s13, 9
    %p294 = pnand %p292, %p293
    %p295 = pneg %p294
    // Predicated region
    $region45: #{tpu_custom_call.1} parent=5 // pred_check
      _
    $region46: #{tpu_custom_call.1} parent=5 // pred_check_branch
      %297 = sbr.rel (%p294) target = $region48
    $region47: #{tpu_custom_call.1} parent=5 // pred_region
      %s298 = ssub.s32 %s13, 1
      %s299 = smul.u32 4, %s23
      %s300 = ssub.s32 18, %s299
      %p301 = scmp.lt.s32.totalorder %s300, 4
      %s302 = scalar_select %p301, %s300, 4
      %s303 = smul.u32 128, %s302
      %s304 = smul.u32 %s303, 2
      %p305 = scmp.lt.s32.totalorder %s22, 1
      %s306 = scalar_select %p305, %s22, 1
      %p307 = scmp.lt.s32.totalorder %s299, 17
      %s308 = scalar_select %p307, %s299, 17
      %s309 = smul.addr %s308, 2
      %s310 = smul.addr %s306, 36
      %s311 = sadd.s32 %s309, %s310
      %s312 = smul.addr %s311, 8
      %s313 = scalar_lea.vmem %s0, %s312
      %p314 = pneg %p53
      %p315 = pneg %p50
      %s316 = sadd.s32 %s23, 1
      %s317 = smul.u32 %s316, 4
      %p318 = scmp.lt.s32.totalorder %s22, 1
      %s319 = scalar_select %p318, %s22, 1
      %p320 = scmp.lt.s32.totalorder %s317, 17
      %s321 = scalar_select %p320, %s317, 17
      %s322 = smul.addr %s321, 2
      %s323 = smul.addr %s319, 36
      %s324 = sadd.s32 %s322, %s323
      %s325 = smul.addr %s324, 8
      %s326 = scalar_lea.vmem %s1, %s325
      %p327 = pneg %p85
      %p328 = pneg %p82
      %p329 = pneg %p106
      %p330 = pneg %p103
      %p331 = pneg %p127
      %p332 = pneg %p124
      %p333 = pneg %p148
      %p334 = pneg %p145
      %p335 = pneg %p169
      %p336 = pneg %p166
      %p337 = pneg %p190
      %p338 = pneg %p187
      %p339 = pneg %p218
      %p340 = pneg %p215
      %s341 = smul.u32 2, %s23
      %p342 = scmp.lt.s32.totalorder %s22, 1
      %s343 = scalar_select %p342, %s22, 1
      %p344 = scmp.lt.s32.totalorder %s341, 7
      %s345 = scalar_select %p344, %s341, 7
      %s346 = smul.addr %s343, 8
      %s347 = sadd.s32 %s345, %s346
      %s348 = smul.addr %s347, 8
      %s349 = scalar_lea.vmem %s7, %s348
      %s350 = smul.u32 4, %s23
      %s351 = ssub.s32 18, %s350
      %p352 = scmp.lt.s32.totalorder %s351, 4
      %s353 = scalar_select %p352, %s351, 4
      %s354 = smul.u32 128, %s353
      %s355 = smul.u32 %s354, 2
      %p356 = scmp.lt.s32.totalorder %s22, 1
      %s357 = scalar_select %p356, %s22, 1
      %p358 = scmp.lt.s32.totalorder %s350, 17
      %s359 = scalar_select %p358, %s350, 17
      %s360 = smul.addr %s359, 2
      %s361 = smul.addr %s357, 36
      %s362 = sadd.s32 %s360, %s361
      %s363 = smul.addr %s362, 8
      %s364 = scalar_lea.vmem %s0, %s363
      %s365 = smul.u32 4, %s23
      %s366 = ssub.s32 18, %s365
      %p367 = scmp.lt.s32.totalorder %s366, 4
      %s368 = scalar_select %p367, %s366, 4
      %s369 = smul.u32 128, %s368
      %s370 = smul.u32 %s369, 2
      %s371 = sadd.s32 %s23, 1
      %s372 = smul.u32 %s371, 4
      %p373 = scmp.lt.s32.totalorder %s22, 1
      %s374 = scalar_select %p373, %s22, 1
      %p375 = scmp.lt.s32.totalorder %s372, 17
      %s376 = scalar_select %p375, %s372, 17
      %s377 = smul.addr %s376, 2
      %s378 = smul.addr %s374, 36
      %s379 = sadd.s32 %s377, %s378
      %s380 = smul.addr %s379, 8
      %s381 = scalar_lea.vmem %s1, %s380
      %s382 = sadd.s32 %s23, 1
      %s383 = smul.u32 %s382, 4
      %s384 = smul.u32 2, %s23
      %p385 = scmp.lt.s32.totalorder %s22, 1
      %s386 = scalar_select %p385, %s22, 1
      %p387 = scmp.lt.s32.totalorder %s384, 7
      %s388 = scalar_select %p387, %s384, 7
      %s389 = smul.addr %s386, 8
      %s390 = sadd.s32 %s388, %s389
      %s391 = smul.addr %s390, 8
      %s392 = scalar_lea.vmem %s7, %s391
      %s393 = smul.u32 2, %s23
      %v394 = vld [vmem:[%s364] sm:$0xff]
      %v395 = vld [vmem:[%s364 + $0x8] sm:$0x1]
      %v396 = vld [vmem:[%s364 + $0x10] sm:$0xff]
      %v397 = vld [vmem:[%s364 + $0x18] sm:$0x1]
      %v398 = vld [vmem:[%s364 + $0x20] sm:$0xff]
      %v399 = vld [vmem:[%s364 + $0x28] sm:$0x1]
      %v400 = vld [vmem:[%s364 + $0x30] sm:$0xff]
      %v401 = vld [vmem:[%s364 + $0x38] sm:$0x1]
      %v402 = vld [vmem:[%s381] sm:$0xff]
      %v403 = vld [vmem:[%s381 + $0x8] sm:$0x1]
      %v404 = vld [vmem:[%s2] sm:$0xff]
      %v405 = vld [vmem:[%s2 + $0x8] sm:$0xff]
      %v406 = vld [vmem:[%s2 + $0x10] sm:$0xff]
      %v407 = vld [vmem:[%s3] sm:$0xf]
      %v408 = vld [vmem:[%s3 + $0x4] sm:$0xf]
      %v409 = vld [vmem:[%s3 + $0x8] sm:$0xf]
      %v414 = vcombine.high %v394, %v394
      %v416 = vunpack.c.l.s4 1966171168
      %v417 = vunpack.c.0.s8 %v416
      %v418 = vlaneseq
      %v419 = vshrl.u32 %v418, 7
      %v420 = vsub.s32 %v417, %v419
      %v421 = vrot.slane %v394, %v420
      %v423 = vunpack.c.l.s4 1966171168
      %v424 = vunpack.c.0.s8 %v423
      %v425 = vlaneseq
      %v426 = vshrl.u32 %v425, 7
      %v427 = vsub.s32 %v424, %v426
      %v428 = vrot.slane %v414, %v427
      %v429 = vcombine.high %v421, %v421
      %v430 = vcombine.high %v428, %v428
      %v432 = vunpack.c.l.s4 1966171168
      %v433 = vunpack.c.0.s8 %v432
      %v434 = vlaneseq
      %v435 = vshrl.u32 %v434, 7
      %v436 = vsub.s32 %v433, %v435
      %v437 = vrot.slane %v421, %v436
      %v439 = vunpack.c.l.s4 1966171168
      %v440 = vunpack.c.0.s8 %v439
      %v441 = vlaneseq
      %v442 = vshrl.u32 %v441, 7
      %v443 = vsub.s32 %v440, %v442
      %v444 = vrot.slane %v428, %v443
      %v446 = vunpack.c.l.s4 1966171168
      %v447 = vunpack.c.0.s8 %v446
      %v448 = vlaneseq
      %v449 = vshrl.u32 %v448, 7
      %v450 = vsub.s32 %v447, %v449
      %v451 = vrot.slane %v429, %v450
      %v453 = vunpack.c.l.s4 1966171168
      %v454 = vunpack.c.0.s8 %v453
      %v455 = vlaneseq
      %v456 = vshrl.u32 %v455, 7
      %v457 = vsub.s32 %v454, %v456
      %v458 = vrot.slane %v430, %v457
      %v459 = vcombine.high %v437, %v437
      %v460 = vcombine.high %v444, %v444
      %v461 = vcombine.high %v451, %v451
      %v462 = vcombine.high %v458, %v458
      %v464 = vunpack.c.l.s4 1966171168
      %v465 = vunpack.c.0.s8 %v464
      %v466 = vlaneseq
      %v467 = vshrl.u32 %v466, 7
      %v468 = vsub.s32 %v465, %v467
      %v469 = vrot.slane %v395, %v468
      %v471 = vunpack.c.l.s4 1966171168
      %v472 = vunpack.c.0.s8 %v471
      %v473 = vlaneseq
      %v474 = vshrl.u32 %v473, 7
      %v475 = vsub.s32 %v472, %v474
      %v476 = vrot.slane %v469, %v475
      %v477 = vcombine.high %v398, %v398
      %v479 = vunpack.c.l.s4 1966171168
      %v480 = vunpack.c.0.s8 %v479
      %v481 = vlaneseq
      %v482 = vshrl.u32 %v481, 7
      %v483 = vsub.s32 %v480, %v482
      %v484 = vrot.slane %v398, %v483
      %v486 = vunpack.c.l.s4 1966171168
      %v487 = vunpack.c.0.s8 %v486
      %v488 = vlaneseq
      %v489 = vshrl.u32 %v488, 7
      %v490 = vsub.s32 %v487, %v489
      %v491 = vrot.slane %v477, %v490
      %v492 = vcombine.high %v484, %v484
      %v493 = vcombine.high %v491, %v491
      %v495 = vunpack.c.l.s4 1966171168
      %v496 = vunpack.c.0.s8 %v495
      %v497 = vlaneseq
      %v498 = vshrl.u32 %v497, 7
      %v499 = vsub.s32 %v496, %v498
      %v500 = vrot.slane %v484, %v499
      %v502 = vunpack.c.l.s4 1966171168
      %v503 = vunpack.c.0.s8 %v502
      %v504 = vlaneseq
      %v505 = vshrl.u32 %v504, 7
      %v506 = vsub.s32 %v503, %v505
      %v507 = vrot.slane %v491, %v506
      %v509 = vunpack.c.l.s4 1966171168
      %v510 = vunpack.c.0.s8 %v509
      %v511 = vlaneseq
      %v512 = vshrl.u32 %v511, 7
      %v513 = vsub.s32 %v510, %v512
      %v514 = vrot.slane %v492, %v513
      %v516 = vunpack.c.l.s4 1966171168
      %v517 = vunpack.c.0.s8 %v516
      %v518 = vlaneseq
      %v519 = vshrl.u32 %v518, 7
      %v520 = vsub.s32 %v517, %v519
      %v521 = vrot.slane %v493, %v520
      %v522 = vcombine.high %v500, %v500
      %v523 = vcombine.high %v507, %v507
      %v524 = vcombine.high %v514, %v514
      %v525 = vcombine.high %v521, %v521
      %v527 = vunpack.c.l.s4 1966171168
      %v528 = vunpack.c.0.s8 %v527
      %v529 = vlaneseq
      %v530 = vshrl.u32 %v529, 7
      %v531 = vsub.s32 %v528, %v530
      %v532 = vrot.slane %v399, %v531
      %v534 = vunpack.c.l.s4 1966171168
      %v535 = vunpack.c.0.s8 %v534
      %v536 = vlaneseq
      %v537 = vshrl.u32 %v536, 7
      %v538 = vsub.s32 %v535, %v537
      %v539 = vrot.slane %v532, %v538
      %v544 = vcombine.high %v396, %v396
      %v546 = vunpack.c.l.s4 1966171168
      %v547 = vunpack.c.0.s8 %v546
      %v548 = vlaneseq
      %v549 = vshrl.u32 %v548, 7
      %v550 = vsub.s32 %v547, %v549
      %v551 = vrot.slane %v396, %v550
      %v553 = vunpack.c.l.s4 1966171168
      %v554 = vunpack.c.0.s8 %v553
      %v555 = vlaneseq
      %v556 = vshrl.u32 %v555, 7
      %v557 = vsub.s32 %v554, %v556
      %v558 = vrot.slane %v544, %v557
      %v559 = vcombine.high %v551, %v551
      %v560 = vcombine.high %v558, %v558
      %v562 = vunpack.c.l.s4 1966171168
      %v563 = vunpack.c.0.s8 %v562
      %v564 = vlaneseq
      %v565 = vshrl.u32 %v564, 7
      %v566 = vsub.s32 %v563, %v565
      %v567 = vrot.slane %v551, %v566
      %v569 = vunpack.c.l.s4 1966171168
      %v570 = vunpack.c.0.s8 %v569
      %v571 = vlaneseq
      %v572 = vshrl.u32 %v571, 7
      %v573 = vsub.s32 %v570, %v572
      %v574 = vrot.slane %v558, %v573
      %v576 = vunpack.c.l.s4 1966171168
      %v577 = vunpack.c.0.s8 %v576
      %v578 = vlaneseq
      %v579 = vshrl.u32 %v578, 7
      %v580 = vsub.s32 %v577, %v579
      %v581 = vrot.slane %v559, %v580
      %v583 = vunpack.c.l.s4 1966171168
      %v584 = vunpack.c.0.s8 %v583
      %v585 = vlaneseq
      %v586 = vshrl.u32 %v585, 7
      %v587 = vsub.s32 %v584, %v586
      %v588 = vrot.slane %v560, %v587
      %v589 = vcombine.high %v567, %v567
      %v590 = vcombine.high %v574, %v574
      %v591 = vcombine.high %v581, %v581
      %v592 = vcombine.high %v588, %v588
      %v594 = vunpack.c.l.s4 1966171168
      %v595 = vunpack.c.0.s8 %v594
      %v596 = vlaneseq
      %v597 = vshrl.u32 %v596, 7
      %v598 = vsub.s32 %v595, %v597
      %v599 = vrot.slane %v397, %v598
      %v601 = vunpack.c.l.s4 1966171168
      %v602 = vunpack.c.0.s8 %v601
      %v603 = vlaneseq
      %v604 = vshrl.u32 %v603, 7
      %v605 = vsub.s32 %v602, %v604
      %v606 = vrot.slane %v599, %v605
      %v607 = vcombine.high %v400, %v400
      %v609 = vunpack.c.l.s4 1966171168
      %v610 = vunpack.c.0.s8 %v609
      %v611 = vlaneseq
      %v612 = vshrl.u32 %v611, 7
      %v613 = vsub.s32 %v610, %v612
      %v614 = vrot.slane %v400, %v613
      %v616 = vunpack.c.l.s4 1966171168
      %v617 = vunpack.c.0.s8 %v616
      %v618 = vlaneseq
      %v619 = vshrl.u32 %v618, 7
      %v620 = vsub.s32 %v617, %v619
      %v621 = vrot.slane %v607, %v620
      %v622 = vcombine.high %v614, %v614
      %v623 = vcombine.high %v621, %v621
      %v625 = vunpack.c.l.s4 1966171168
      %v626 = vunpack.c.0.s8 %v625
      %v627 = vlaneseq
      %v628 = vshrl.u32 %v627, 7
      %v629 = vsub.s32 %v626, %v628
      %v630 = vrot.slane %v614, %v629
      %v632 = vunpack.c.l.s4 1966171168
      %v633 = vunpack.c.0.s8 %v632
      %v634 = vlaneseq
      %v635 = vshrl.u32 %v634, 7
      %v636 = vsub.s32 %v633, %v635
      %v637 = vrot.slane %v621, %v636
      %v639 = vunpack.c.l.s4 1966171168
      %v640 = vunpack.c.0.s8 %v639
      %v641 = vlaneseq
      %v642 = vshrl.u32 %v641, 7
      %v643 = vsub.s32 %v640, %v642
      %v644 = vrot.slane %v622, %v643
      %v646 = vunpack.c.l.s4 1966171168
      %v647 = vunpack.c.0.s8 %v646
      %v648 = vlaneseq
      %v649 = vshrl.u32 %v648, 7
      %v650 = vsub.s32 %v647, %v649
      %v651 = vrot.slane %v623, %v650
      %v652 = vcombine.high %v630, %v630
      %v653 = vcombine.high %v637, %v637
      %v654 = vcombine.high %v644, %v644
      %v655 = vcombine.high %v651, %v651
      %v657 = vunpack.c.l.s4 1966171168
      %v658 = vunpack.c.0.s8 %v657
      %v659 = vlaneseq
      %v660 = vshrl.u32 %v659, 7
      %v661 = vsub.s32 %v658, %v660
      %v662 = vrot.slane %v401, %v661
      %v664 = vunpack.c.l.s4 1966171168
      %v665 = vunpack.c.0.s8 %v664
      %v666 = vlaneseq
      %v667 = vshrl.u32 %v666, 7
      %v668 = vsub.s32 %v665, %v667
      %v669 = vrot.slane %v662, %v668
      %v670 = vcombine.low %v567, %v581
      %v671 = vcombine.low %v589, %v591
      %v672 = vcombine.low %v574, %v588
      %v673 = vcombine.low %v590, %v592
      %v675 = vunpack.c.l.s4 1966171168
      %v676 = vunpack.c.0.s8 %v675
      %v677 = vlaneseq
      %v678 = vshrl.u32 %v677, 7
      %v679 = vsub.s32 %v676, %v678
      %v680 = vrot.slane %v670, %v679
      %v682 = vunpack.c.l.s4 1966171168
      %v683 = vunpack.c.0.s8 %v682
      %v684 = vlaneseq
      %v685 = vshrl.u32 %v684, 7
      %v686 = vsub.s32 %v683, %v685
      %v687 = vrot.slane %v671, %v686
      %v689 = vunpack.c.l.s4 1966171168
      %v690 = vunpack.c.0.s8 %v689
      %v691 = vlaneseq
      %v692 = vshrl.u32 %v691, 7
      %v693 = vsub.s32 %v690, %v692
      %v694 = vrot.slane %v672, %v693
      %v696 = vunpack.c.l.s4 1966171168
      %v697 = vunpack.c.0.s8 %v696
      %v698 = vlaneseq
      %v699 = vshrl.u32 %v698, 7
      %v700 = vsub.s32 %v697, %v699
      %v701 = vrot.slane %v673, %v700
      %v702 = vcombine.low %v680, %v687
      %v703 = vcombine.low %v694, %v701
      %v705 = vunpack.c.l.s4 1966171168
      %v706 = vunpack.c.0.s8 %v705
      %v707 = vlaneseq
      %v708 = vshrl.u32 %v707, 7
      %v709 = vsub.s32 %v706, %v708
      %v710 = vrot.slane %v702, %v709
      %v712 = vunpack.c.l.s4 1966171168
      %v713 = vunpack.c.0.s8 %v712
      %v714 = vlaneseq
      %v715 = vshrl.u32 %v714, 7
      %v716 = vsub.s32 %v713, %v715
      %v717 = vrot.slane %v703, %v716
      %v718 = vcombine.low %v710, %v717
      %v719 = vcombine.low %v606, %v630
      %v720 = vcombine.low %v644, %v652
      %v721 = vcombine.low %v654, %v637
      %v722 = vcombine.low %v651, %v653
      %v724 = vunpack.c.l.s4 1966171168
      %v725 = vunpack.c.0.s8 %v724
      %v726 = vlaneseq
      %v727 = vshrl.u32 %v726, 7
      %v728 = vsub.s32 %v725, %v727
      %v729 = vrot.slane %v719, %v728
      %v731 = vunpack.c.l.s4 1966171168
      %v732 = vunpack.c.0.s8 %v731
      %v733 = vlaneseq
      %v734 = vshrl.u32 %v733, 7
      %v735 = vsub.s32 %v732, %v734
      %v736 = vrot.slane %v720, %v735
      %v738 = vunpack.c.l.s4 1966171168
      %v739 = vunpack.c.0.s8 %v738
      %v740 = vlaneseq
      %v741 = vshrl.u32 %v740, 7
      %v742 = vsub.s32 %v739, %v741
      %v743 = vrot.slane %v721, %v742
      %v745 = vunpack.c.l.s4 1966171168
      %v746 = vunpack.c.0.s8 %v745
      %v747 = vlaneseq
      %v748 = vshrl.u32 %v747, 7
      %v749 = vsub.s32 %v746, %v748
      %v750 = vrot.slane %v722, %v749
      %v751 = vcombine.low %v729, %v736
      %v752 = vcombine.low %v743, %v750
      %v754 = vunpack.c.l.s4 1966171168
      %v755 = vunpack.c.0.s8 %v754
      %v756 = vlaneseq
      %v757 = vshrl.u32 %v756, 7
      %v758 = vsub.s32 %v755, %v757
      %v759 = vrot.slane %v751, %v758
      %v761 = vunpack.c.l.s4 1966171168
      %v762 = vunpack.c.0.s8 %v761
      %v763 = vlaneseq
      %v764 = vshrl.u32 %v763, 7
      %v765 = vsub.s32 %v762, %v764
      %v766 = vrot.slane %v752, %v765
      %v767 = vcombine.low %v759, %v766
      %v768 = vcombine.low %v655, %v669
      %v770 = vunpack.c.l.s4 1966171168
      %v771 = vunpack.c.0.s8 %v770
      %v772 = vlaneseq
      %v773 = vshrl.u32 %v772, 7
      %v774 = vsub.s32 %v771, %v773
      %v775 = vrot.slane %v768, %v774
      %v777 = vunpack.c.l.s4 1966171168
      %v778 = vunpack.c.0.s8 %v777
      %v779 = vlaneseq
      %v780 = vshrl.u32 %v779, 7
      %v781 = vsub.s32 %v778, %v780
      %v782 = vrot.slane %v775, %v781
      %vm783 = vcmask 64512
      %v784 = vsel %vm783, %v718, 0
      %v786 = vsel %vm783, %v767, 0
      %v788 = vsel %vm783, %v782, 0
      %790 = vmatprep.subr.mxu0 0.0
      %791 = vmatpush1.msra.mxu0 0.0
      %792 = vmatprep.subr.mxu0 0.0
      %793 = vmatpush1.msra.mxu0 0.0
      %794 = vmatprep.subr.mxu0 0.0
      %795 = vmatpush1.msra.mxu0 0.0
      %796 = vmatprep.subr.mxu0 0.0
      %797 = vmatpush1.msra.mxu0 0.0
      %798 = vmatprep.subr.mxu0 0.0
      %799 = vmatpush1.msra.mxu0 0.0
      %800 = vmatprep.subr.mxu0 0.0
      %801 = vmatpush1.msra.mxu0 0.0
      %802 = vmatprep.subr.mxu0 0.0
      %803 = vmatpush1.msra.mxu0 0.0
      %804 = vmatprep.subr.mxu0 0.0
      %805 = vmatpush1.msra.mxu0 0.0
      %806 = vmatprep.subr.mxu0 0.0
      %807 = vmatpush1.msra.mxu0 0.0
      %808 = vmatprep.subr.mxu0 0.0
      %809 = vmatpush1.msra.mxu0 0.0
      %810 = vmatprep.subr.mxu0 0.0
      %811 = vmatpush1.msra.mxu0 0.0
      %812 = vmatprep.subr.mxu0 0.0
      %813 = vmatpush1.msra.mxu0 0.0
      %814 = vmatprep.subr.mxu0 0.0
      %815 = vmatpush1.msra.mxu0 0.0
      %816 = vmatprep.subr.mxu0 0.0
      %817 = vmatpush1.msra.mxu0 0.0
      %818 = vmatprep.subr.mxu0 0.0
      %819 = vmatpush1.msra.mxu0 0.0
      %820 = vmatprep.subr.mxu0 0.0
      %821 = vmatpush1.msra.mxu0 %v405
      %822 = vmatprep.subr.mxu0 0.0
      %823 = vmatpush2.msra.mxu0 0.0
      %824 = vmatprep.subr.mxu0 0.0
      %825 = vmatpush2.msra.mxu0 0.0
      %826 = vmatprep.subr.mxu0 0.0
      %827 = vmatpush2.msra.mxu0 0.0
      %828 = vmatprep.subr.mxu0 0.0
      %829 = vmatpush2.msra.mxu0 0.0
      %830 = vmatprep.subr.mxu0 0.0
      %831 = vmatpush2.msra.mxu0 0.0
      %832 = vmatprep.subr.mxu0 0.0
      %833 = vmatpush2.msra.mxu0 0.0
      %834 = vmatprep.subr.mxu0 0.0
      %835 = vmatpush2.msra.mxu0 0.0
      %836 = vmatprep.subr.mxu0 0.0
      %837 = vmatpush2.msra.mxu0 0.0
      %838 = vmatprep.subr.mxu0 0.0
      %839 = vmatpush2.msra.mxu0 0.0
      %840 = vmatprep.subr.mxu0 0.0
      %841 = vmatpush2.msra.mxu0 0.0
      %842 = vmatprep.subr.mxu0 0.0
      %843 = vmatpush2.msra.mxu0 0.0
      %844 = vmatprep.subr.mxu0 0.0
      %845 = vmatpush2.msra.mxu0 0.0
      %846 = vmatprep.subr.mxu0 0.0
      %847 = vmatpush2.msra.mxu0 0.0
      %848 = vmatprep.subr.mxu0 0.0
      %849 = vmatpush2.msra.mxu0 0.0
      %850 = vmatprep.subr.mxu0 0.0
      %851 = vmatpush2.msra.mxu0 0.0
      %852 = vmatprep.subr.mxu0 0.0
      %853 = vmatpush2.msra.mxu0 0.0
      %854 = vmatprep.mubr.f32.mxu0 0.0
      %855 = vmatmul.mubr.f32.gmra.mxu0 %v784
      %v856 = vpop.f32.mrf.mxu0
      %v857 = vadd.f32 0.0, %v856
      %v858 = vpop.f32.mrf.mxu0
      %859 = vmatprep.mubr.f32.mxu0 0.0
      %860 = vmatmul.mubr.f32.gmra.mxu0 %v786
      %v861 = vpop.f32.mrf.mxu0
      %v862 = vadd.f32 0.0, %v861
      %v863 = vpop.f32.mrf.mxu0
      %864 = vmatprep.mubr.f32.mxu0 0.0
      %865 = vmatmul.mubr.f32.gmra.mxu0 %v788
      %v866 = vpop.f32.mrf.mxu0
      %v867 = vadd.f32 0.0, %v866
      %v868 = vpop.f32.mrf.mxu0
      %869 = vdwg.mxu0
      %v870 = vcombine.low %v437, %v451
      %v871 = vcombine.low %v459, %v461
      %v872 = vcombine.low %v444, %v458
      %v873 = vcombine.low %v460, %v462
      %v875 = vunpack.c.l.s4 1966171168
      %v876 = vunpack.c.0.s8 %v875
      %v877 = vlaneseq
      %v878 = vshrl.u32 %v877, 7
      %v879 = vsub.s32 %v876, %v878
      %v880 = vrot.slane %v870, %v879
      %v882 = vunpack.c.l.s4 1966171168
      %v883 = vunpack.c.0.s8 %v882
      %v884 = vlaneseq
      %v885 = vshrl.u32 %v884, 7
      %v886 = vsub.s32 %v883, %v885
      %v887 = vrot.slane %v871, %v886
      %v889 = vunpack.c.l.s4 1966171168
      %v890 = vunpack.c.0.s8 %v889
      %v891 = vlaneseq
      %v892 = vshrl.u32 %v891, 7
      %v893 = vsub.s32 %v890, %v892
      %v894 = vrot.slane %v872, %v893
      %v896 = vunpack.c.l.s4 1966171168
      %v897 = vunpack.c.0.s8 %v896
      %v898 = vlaneseq
      %v899 = vshrl.u32 %v898, 7
      %v900 = vsub.s32 %v897, %v899
      %v901 = vrot.slane %v873, %v900
      %v902 = vcombine.low %v880, %v887
      %v903 = vcombine.low %v894, %v901
      %v905 = vunpack.c.l.s4 1966171168
      %v906 = vunpack.c.0.s8 %v905
      %v907 = vlaneseq
      %v908 = vshrl.u32 %v907, 7
      %v909 = vsub.s32 %v906, %v908
      %v910 = vrot.slane %v902, %v909
      %v912 = vunpack.c.l.s4 1966171168
      %v913 = vunpack.c.0.s8 %v912
      %v914 = vlaneseq
      %v915 = vshrl.u32 %v914, 7
      %v916 = vsub.s32 %v913, %v915
      %v917 = vrot.slane %v903, %v916
      %v918 = vcombine.low %v910, %v917
      %v919 = vcombine.low %v476, %v500
      %v920 = vcombine.low %v514, %v522
      %v921 = vcombine.low %v524, %v507
      %v922 = vcombine.low %v521, %v523
      %v924 = vunpack.c.l.s4 1966171168
      %v925 = vunpack.c.0.s8 %v924
      %v926 = vlaneseq
      %v927 = vshrl.u32 %v926, 7
      %v928 = vsub.s32 %v925, %v927
      %v929 = vrot.slane %v919, %v928
      %v931 = vunpack.c.l.s4 1966171168
      %v932 = vunpack.c.0.s8 %v931
      %v933 = vlaneseq
      %v934 = vshrl.u32 %v933, 7
      %v935 = vsub.s32 %v932, %v934
      %v936 = vrot.slane %v920, %v935
      %v938 = vunpack.c.l.s4 1966171168
      %v939 = vunpack.c.0.s8 %v938
      %v940 = vlaneseq
      %v941 = vshrl.u32 %v940, 7
      %v942 = vsub.s32 %v939, %v941
      %v943 = vrot.slane %v921, %v942
      %v945 = vunpack.c.l.s4 1966171168
      %v946 = vunpack.c.0.s8 %v945
      %v947 = vlaneseq
      %v948 = vshrl.u32 %v947, 7
      %v949 = vsub.s32 %v946, %v948
      %v950 = vrot.slane %v922, %v949
      %v951 = vcombine.low %v929, %v936
      %v952 = vcombine.low %v943, %v950
      %v954 = vunpack.c.l.s4 1966171168
      %v955 = vunpack.c.0.s8 %v954
      %v956 = vlaneseq
      %v957 = vshrl.u32 %v956, 7
      %v958 = vsub.s32 %v955, %v957
      %v959 = vrot.slane %v951, %v958
      %v961 = vunpack.c.l.s4 1966171168
      %v962 = vunpack.c.0.s8 %v961
      %v963 = vlaneseq
      %v964 = vshrl.u32 %v963, 7
      %v965 = vsub.s32 %v962, %v964
      %v966 = vrot.slane %v952, %v965
      %v967 = vcombine.low %v959, %v966
      %v968 = vcombine.low %v525, %v539
      %v970 = vunpack.c.l.s4 1966171168
      %v971 = vunpack.c.0.s8 %v970
      %v972 = vlaneseq
      %v973 = vshrl.u32 %v972, 7
      %v974 = vsub.s32 %v971, %v973
      %v975 = vrot.slane %v968, %v974
      %v977 = vunpack.c.l.s4 1966171168
      %v978 = vunpack.c.0.s8 %v977
      %v979 = vlaneseq
      %v980 = vshrl.u32 %v979, 7
      %v981 = vsub.s32 %v978, %v980
      %v982 = vrot.slane %v975, %v981
      %v983 = vsel %vm783, %v918, 0
      %v985 = vsel %vm783, %v967, 0
      %v987 = vsel %vm783, %v982, 0
      %989 = vmatprep.subr.mxu0 0.0
      %990 = vmatpush1.msra.mxu0 0.0
      %991 = vmatprep.subr.mxu0 0.0
      %992 = vmatpush1.msra.mxu0 0.0
      %993 = vmatprep.subr.mxu0 0.0
      %994 = vmatpush1.msra.mxu0 0.0
      %995 = vmatprep.subr.mxu0 0.0
      %996 = vmatpush1.msra.mxu0 0.0
      %997 = vmatprep.subr.mxu0 0.0
      %998 = vmatpush1.msra.mxu0 0.0
      %999 = vmatprep.subr.mxu0 0.0
      %1000 = vmatpush1.msra.mxu0 0.0
      %1001 = vmatprep.subr.mxu0 0.0
      %1002 = vmatpush1.msra.mxu0 0.0
      %1003 = vmatprep.subr.mxu0 0.0
      %1004 = vmatpush1.msra.mxu0 0.0
      %1005 = vmatprep.subr.mxu0 0.0
      %1006 = vmatpush1.msra.mxu0 0.0
      %1007 = vmatprep.subr.mxu0 0.0
      %1008 = vmatpush1.msra.mxu0 0.0
      %1009 = vmatprep.subr.mxu0 0.0
      %1010 = vmatpush1.msra.mxu0 0.0
      %1011 = vmatprep.subr.mxu0 0.0
      %1012 = vmatpush1.msra.mxu0 0.0
      %1013 = vmatprep.subr.mxu0 0.0
      %1014 = vmatpush1.msra.mxu0 0.0
      %1015 = vmatprep.subr.mxu0 0.0
      %1016 = vmatpush1.msra.mxu0 0.0
      %1017 = vmatprep.subr.mxu0 0.0
      %1018 = vmatpush1.msra.mxu0 0.0
      %1019 = vmatprep.subr.mxu0 0.0
      %1020 = vmatpush1.msra.mxu0 %v404
      %1021 = vmatprep.subr.mxu0 0.0
      %1022 = vmatpush2.msra.mxu0 0.0
      %1023 = vmatprep.subr.mxu0 0.0
      %1024 = vmatpush2.msra.mxu0 0.0
      %1025 = vmatprep.subr.mxu0 0.0
      %1026 = vmatpush2.msra.mxu0 0.0
      %1027 = vmatprep.subr.mxu0 0.0
      %1028 = vmatpush2.msra.mxu0 0.0
      %1029 = vmatprep.subr.mxu0 0.0
      %1030 = vmatpush2.msra.mxu0 0.0
      %1031 = vmatprep.subr.mxu0 0.0
      %1032 = vmatpush2.msra.mxu0 0.0
      %1033 = vmatprep.subr.mxu0 0.0
      %1034 = vmatpush2.msra.mxu0 0.0
      %1035 = vmatprep.subr.mxu0 0.0
      %1036 = vmatpush2.msra.mxu0 0.0
      %1037 = vmatprep.subr.mxu0 0.0
      %1038 = vmatpush2.msra.mxu0 0.0
      %1039 = vmatprep.subr.mxu0 0.0
      %1040 = vmatpush2.msra.mxu0 0.0
      %1041 = vmatprep.subr.mxu0 0.0
      %1042 = vmatpush2.msra.mxu0 0.0
      %1043 = vmatprep.subr.mxu0 0.0
      %1044 = vmatpush2.msra.mxu0 0.0
      %1045 = vmatprep.subr.mxu0 0.0
      %1046 = vmatpush2.msra.mxu0 0.0
      %1047 = vmatprep.subr.mxu0 0.0
      %1048 = vmatpush2.msra.mxu0 0.0
      %1049 = vmatprep.subr.mxu0 0.0
      %1050 = vmatpush2.msra.mxu0 0.0
      %1051 = vmatprep.subr.mxu0 0.0
      %1052 = vmatpush2.msra.mxu0 0.0
      %1053 = vmatprep.mubr.f32.mxu0 0.0
      %1054 = vmatmul.mubr.f32.gmra.mxu0 %v983
      %v1055 = vpop.f32.mrf.mxu0
      %v1056 = vadd.f32 %v857, %v1055
      %v1057 = vpop.f32.mrf.mxu0
      %1058 = vmatprep.mubr.f32.mxu0 0.0
      %1059 = vmatmul.mubr.f32.gmra.mxu0 %v985
      %v1060 = vpop.f32.mrf.mxu0
      %v1061 = vadd.f32 %v862, %v1060
      %v1062 = vpop.f32.mrf.mxu0
      %1063 = vmatprep.mubr.f32.mxu0 0.0
      %1064 = vmatmul.mubr.f32.gmra.mxu0 %v987
      %v1065 = vpop.f32.mrf.mxu0
      %v1066 = vadd.f32 %v867, %v1065
      %v1067 = vpop.f32.mrf.mxu0
      %1068 = vdwg.mxu0
      %vm1069 = vcmask 31744
      %v1070 = vsel %vm1069, %v718, 0
      %v1072 = vsel %vm1069, %v767, 0
      %v1074 = vsel %vm1069, %v782, 0
      %vm1076 = vcmask 1043456
      %v1078 = vsel %vm1076, %v408, 0
      %1080 = vmatprep.subr.mxu0 0.0
      %1081 = vmatpush1.msra.mxu0 0.0
      %1082 = vmatprep.subr.mxu0 0.0
      %1083 = vmatpush1.msra.mxu0 0.0
      %1084 = vmatprep.subr.mxu0 0.0
      %1085 = vmatpush1.msra.mxu0 0.0
      %1086 = vmatprep.subr.mxu0 0.0
      %1087 = vmatpush1.msra.mxu0 0.0
      %1088 = vmatprep.subr.mxu0 0.0
      %1089 = vmatpush1.msra.mxu0 0.0
      %1090 = vmatprep.subr.mxu0 0.0
      %1091 = vmatpush1.msra.mxu0 0.0
      %1092 = vmatprep.subr.mxu0 0.0
      %1093 = vmatpush1.msra.mxu0 0.0
      %1094 = vmatprep.subr.mxu0 0.0
      %1095 = vmatpush1.msra.mxu0 0.0
      %1096 = vmatprep.subr.mxu0 0.0
      %1097 = vmatpush1.msra.mxu0 0.0
      %1098 = vmatprep.subr.mxu0 0.0
      %1099 = vmatpush1.msra.mxu0 0.0
      %1100 = vmatprep.subr.mxu0 0.0
      %1101 = vmatpush1.msra.mxu0 0.0
      %1102 = vmatprep.subr.mxu0 0.0
      %1103 = vmatpush1.msra.mxu0 0.0
      %1104 = vmatprep.subr.mxu0 0.0
      %1105 = vmatpush1.msra.mxu0 0.0
      %1106 = vmatprep.subr.mxu0 0.0
      %1107 = vmatpush1.msra.mxu0 0.0
      %1108 = vmatprep.subr.mxu0 0.0
      %1109 = vmatpush1.msra.mxu0 0.0
      %1110 = vmatprep.subr.mxu0 0.0
      %1111 = vmatpush1.msra.mxu0 %v1078
      %1112 = vmatprep.subr.mxu0 0.0
      %1113 = vmatpush2.msra.mxu0 0.0
      %1114 = vmatprep.subr.mxu0 0.0
      %1115 = vmatpush2.msra.mxu0 0.0
      %1116 = vmatprep.subr.mxu0 0.0
      %1117 = vmatpush2.msra.mxu0 0.0
      %1118 = vmatprep.subr.mxu0 0.0
      %1119 = vmatpush2.msra.mxu0 0.0
      %1120 = vmatprep.subr.mxu0 0.0
      %1121 = vmatpush2.msra.mxu0 0.0
      %1122 = vmatprep.subr.mxu0 0.0
      %1123 = vmatpush2.msra.mxu0 0.0
      %1124 = vmatprep.subr.mxu0 0.0
      %1125 = vmatpush2.msra.mxu0 0.0
      %1126 = vmatprep.subr.mxu0 0.0
      %1127 = vmatpush2.msra.mxu0 0.0
      %1128 = vmatprep.subr.mxu0 0.0
      %1129 = vmatpush2.msra.mxu0 0.0
      %1130 = vmatprep.subr.mxu0 0.0
      %1131 = vmatpush2.msra.mxu0 0.0
      %1132 = vmatprep.subr.mxu0 0.0
      %1133 = vmatpush2.msra.mxu0 0.0
      %1134 = vmatprep.subr.mxu0 0.0
      %1135 = vmatpush2.msra.mxu0 0.0
      %1136 = vmatprep.subr.mxu0 0.0
      %1137 = vmatpush2.msra.mxu0 0.0
      %1138 = vmatprep.subr.mxu0 0.0
      %1139 = vmatpush2.msra.mxu0 0.0
      %1140 = vmatprep.subr.mxu0 0.0
      %1141 = vmatpush2.msra.mxu0 0.0
      %1142 = vmatprep.subr.mxu0 0.0
      %1143 = vmatpush2.msra.mxu0 0.0
      %1144 = vmatprep.mubr.f32.mxu0 0.0
      %1145 = vmatmul.mubr.f32.gmra.mxu0 %v1070
      %v1146 = vpop.f32.mrf.mxu0
      %v1147 = vadd.f32 0.0, %v1146
      %v1148 = vpop.f32.mrf.mxu0
      %1149 = vmatprep.mubr.f32.mxu0 0.0
      %1150 = vmatmul.mubr.f32.gmra.mxu0 %v1072
      %v1151 = vpop.f32.mrf.mxu0
      %v1152 = vadd.f32 0.0, %v1151
      %v1153 = vpop.f32.mrf.mxu0
      %1154 = vmatprep.mubr.f32.mxu0 0.0
      %1155 = vmatmul.mubr.f32.gmra.mxu0 %v1074
      %v1156 = vpop.f32.mrf.mxu0
      %v1157 = vadd.f32 0.0, %v1156
      %v1158 = vpop.f32.mrf.mxu0
      %1159 = vdwg.mxu0
      %v1160 = vsel %vm1069, %v918, 0
      %v1162 = vsel %vm1069, %v967, 0
      %v1164 = vsel %vm1069, %v982, 0
      %v1167 = vsel %vm1076, %v407, 0
      %1169 = vmatprep.subr.mxu0 0.0
      %1170 = vmatpush1.msra.mxu0 0.0
      %1171 = vmatprep.subr.mxu0 0.0
      %1172 = vmatpush1.msra.mxu0 0.0
      %1173 = vmatprep.subr.mxu0 0.0
      %1174 = vmatpush1.msra.mxu0 0.0
      %1175 = vmatprep.subr.mxu0 0.0
      %1176 = vmatpush1.msra.mxu0 0.0
      %1177 = vmatprep.subr.mxu0 0.0
      %1178 = vmatpush1.msra.mxu0 0.0
      %1179 = vmatprep.subr.mxu0 0.0
      %1180 = vmatpush1.msra.mxu0 0.0
      %1181 = vmatprep.subr.mxu0 0.0
      %1182 = vmatpush1.msra.mxu0 0.0
      %1183 = vmatprep.subr.mxu0 0.0
      %1184 = vmatpush1.msra.mxu0 0.0
      %1185 = vmatprep.subr.mxu0 0.0
      %1186 = vmatpush1.msra.mxu0 0.0
      %1187 = vmatprep.subr.mxu0 0.0
      %1188 = vmatpush1.msra.mxu0 0.0
      %1189 = vmatprep.subr.mxu0 0.0
      %1190 = vmatpush1.msra.mxu0 0.0
      %1191 = vmatprep.subr.mxu0 0.0
      %1192 = vmatpush1.msra.mxu0 0.0
      %1193 = vmatprep.subr.mxu0 0.0
      %1194 = vmatpush1.msra.mxu0 0.0
      %1195 = vmatprep.subr.mxu0 0.0
      %1196 = vmatpush1.msra.mxu0 0.0
      %1197 = vmatprep.subr.mxu0 0.0
      %1198 = vmatpush1.msra.mxu0 0.0
      %1199 = vmatprep.subr.mxu0 0.0
      %1200 = vmatpush1.msra.mxu0 %v1167
      %1201 = vmatprep.subr.mxu0 0.0
      %1202 = vmatpush2.msra.mxu0 0.0
      %1203 = vmatprep.subr.mxu0 0.0
      %1204 = vmatpush2.msra.mxu0 0.0
      %1205 = vmatprep.subr.mxu0 0.0
      %1206 = vmatpush2.msra.mxu0 0.0
      %1207 = vmatprep.subr.mxu0 0.0
      %1208 = vmatpush2.msra.mxu0 0.0
      %1209 = vmatprep.subr.mxu0 0.0
      %1210 = vmatpush2.msra.mxu0 0.0
      %1211 = vmatprep.subr.mxu0 0.0
      %1212 = vmatpush2.msra.mxu0 0.0
      %1213 = vmatprep.subr.mxu0 0.0
      %1214 = vmatpush2.msra.mxu0 0.0
      %1215 = vmatprep.subr.mxu0 0.0
      %1216 = vmatpush2.msra.mxu0 0.0
      %1217 = vmatprep.subr.mxu0 0.0
      %1218 = vmatpush2.msra.mxu0 0.0
      %1219 = vmatprep.subr.mxu0 0.0
      %1220 = vmatpush2.msra.mxu0 0.0
      %1221 = vmatprep.subr.mxu0 0.0
      %1222 = vmatpush2.msra.mxu0 0.0
      %1223 = vmatprep.subr.mxu0 0.0
      %1224 = vmatpush2.msra.mxu0 0.0
      %1225 = vmatprep.subr.mxu0 0.0
      %1226 = vmatpush2.msra.mxu0 0.0
      %1227 = vmatprep.subr.mxu0 0.0
      %1228 = vmatpush2.msra.mxu0 0.0
      %1229 = vmatprep.subr.mxu0 0.0
      %1230 = vmatpush2.msra.mxu0 0.0
      %1231 = vmatprep.subr.mxu0 0.0
      %1232 = vmatpush2.msra.mxu0 0.0
      %1233 = vmatprep.mubr.f32.mxu0 0.0
      %1234 = vmatmul.mubr.f32.gmra.mxu0 %v1160
      %v1235 = vpop.f32.mrf.mxu0
      %v1236 = vadd.f32 %v1147, %v1235
      %v1237 = vpop.f32.mrf.mxu0
      %1238 = vmatprep.mubr.f32.mxu0 0.0
      %1239 = vmatmul.mubr.f32.gmra.mxu0 %v1162
      %v1240 = vpop.f32.mrf.mxu0
      %v1241 = vadd.f32 %v1152, %v1240
      %v1242 = vpop.f32.mrf.mxu0
      %1243 = vmatprep.mubr.f32.mxu0 0.0
      %1244 = vmatmul.mubr.f32.gmra.mxu0 %v1164
      %v1245 = vpop.f32.mrf.mxu0
      %v1246 = vadd.f32 %v1157, %v1245
      %v1247 = vpop.f32.mrf.mxu0
      %1248 = vdwg.mxu0
      %v1251 = vcombine.high %v402, %v402
      %v1253 = vunpack.c.l.s4 1966171168
      %v1254 = vunpack.c.0.s8 %v1253
      %v1255 = vlaneseq
      %v1256 = vshrl.u32 %v1255, 7
      %v1257 = vsub.s32 %v1254, %v1256
      %v1258 = vrot.slane %v402, %v1257
      %v1260 = vunpack.c.l.s4 1966171168
      %v1261 = vunpack.c.0.s8 %v1260
      %v1262 = vlaneseq
      %v1263 = vshrl.u32 %v1262, 7
      %v1264 = vsub.s32 %v1261, %v1263
      %v1265 = vrot.slane %v1251, %v1264
      %v1266 = vcombine.high %v1258, %v1258
      %v1267 = vcombine.high %v1265, %v1265
      %v1269 = vunpack.c.l.s4 1966171168
      %v1270 = vunpack.c.0.s8 %v1269
      %v1271 = vlaneseq
      %v1272 = vshrl.u32 %v1271, 7
      %v1273 = vsub.s32 %v1270, %v1272
      %v1274 = vrot.slane %v1258, %v1273
      %v1276 = vunpack.c.l.s4 1966171168
      %v1277 = vunpack.c.0.s8 %v1276
      %v1278 = vlaneseq
      %v1279 = vshrl.u32 %v1278, 7
      %v1280 = vsub.s32 %v1277, %v1279
      %v1281 = vrot.slane %v1265, %v1280
      %v1283 = vunpack.c.l.s4 1966171168
      %v1284 = vunpack.c.0.s8 %v1283
      %v1285 = vlaneseq
      %v1286 = vshrl.u32 %v1285, 7
      %v1287 = vsub.s32 %v1284, %v1286
      %v1288 = vrot.slane %v1266, %v1287
      %v1290 = vunpack.c.l.s4 1966171168
      %v1291 = vunpack.c.0.s8 %v1290
      %v1292 = vlaneseq
      %v1293 = vshrl.u32 %v1292, 7
      %v1294 = vsub.s32 %v1291, %v1293
      %v1295 = vrot.slane %v1267, %v1294
      %v1296 = vcombine.high %v1274, %v1274
      %v1297 = vcombine.high %v1281, %v1281
      %v1298 = vcombine.high %v1288, %v1288
      %v1299 = vcombine.high %v1295, %v1295
      %v1301 = vunpack.c.l.s4 1966171168
      %v1302 = vunpack.c.0.s8 %v1301
      %v1303 = vlaneseq
      %v1304 = vshrl.u32 %v1303, 7
      %v1305 = vsub.s32 %v1302, %v1304
      %v1306 = vrot.slane %v403, %v1305
      %v1308 = vunpack.c.l.s4 1966171168
      %v1309 = vunpack.c.0.s8 %v1308
      %v1310 = vlaneseq
      %v1311 = vshrl.u32 %v1310, 7
      %v1312 = vsub.s32 %v1309, %v1311
      %v1313 = vrot.slane %v1306, %v1312
      %v1314 = vcombine.low %v500, %v514
      %v1315 = vcombine.low %v522, %v524
      %v1316 = vcombine.low %v507, %v521
      %v1317 = vcombine.low %v523, %v525
      %v1319 = vunpack.c.l.s4 1966171168
      %v1320 = vunpack.c.0.s8 %v1319
      %v1321 = vlaneseq
      %v1322 = vshrl.u32 %v1321, 7
      %v1323 = vsub.s32 %v1320, %v1322
      %v1324 = vrot.slane %v1314, %v1323
      %v1326 = vunpack.c.l.s4 1966171168
      %v1327 = vunpack.c.0.s8 %v1326
      %v1328 = vlaneseq
      %v1329 = vshrl.u32 %v1328, 7
      %v1330 = vsub.s32 %v1327, %v1329
      %v1331 = vrot.slane %v1315, %v1330
      %v1333 = vunpack.c.l.s4 1966171168
      %v1334 = vunpack.c.0.s8 %v1333
      %v1335 = vlaneseq
      %v1336 = vshrl.u32 %v1335, 7
      %v1337 = vsub.s32 %v1334, %v1336
      %v1338 = vrot.slane %v1316, %v1337
      %v1340 = vunpack.c.l.s4 1966171168
      %v1341 = vunpack.c.0.s8 %v1340
      %v1342 = vlaneseq
      %v1343 = vshrl.u32 %v1342, 7
      %v1344 = vsub.s32 %v1341, %v1343
      %v1345 = vrot.slane %v1317, %v1344
      %v1346 = vcombine.low %v1324, %v1331
      %v1347 = vcombine.low %v1338, %v1345
      %v1349 = vunpack.c.l.s4 1966171168
      %v1350 = vunpack.c.0.s8 %v1349
      %v1351 = vlaneseq
      %v1352 = vshrl.u32 %v1351, 7
      %v1353 = vsub.s32 %v1350, %v1352
      %v1354 = vrot.slane %v1346, %v1353
      %v1356 = vunpack.c.l.s4 1966171168
      %v1357 = vunpack.c.0.s8 %v1356
      %v1358 = vlaneseq
      %v1359 = vshrl.u32 %v1358, 7
      %v1360 = vsub.s32 %v1357, %v1359
      %v1361 = vrot.slane %v1347, %v1360
      %v1362 = vcombine.low %v1354, %v1361
      %v1363 = vcombine.low %v539, %v1274
      %v1364 = vcombine.low %v1288, %v1296
      %v1365 = vcombine.low %v1298, %v1281
      %v1366 = vcombine.low %v1295, %v1297
      %v1368 = vunpack.c.l.s4 1966171168
      %v1369 = vunpack.c.0.s8 %v1368
      %v1370 = vlaneseq
      %v1371 = vshrl.u32 %v1370, 7
      %v1372 = vsub.s32 %v1369, %v1371
      %v1373 = vrot.slane %v1363, %v1372
      %v1375 = vunpack.c.l.s4 1966171168
      %v1376 = vunpack.c.0.s8 %v1375
      %v1377 = vlaneseq
      %v1378 = vshrl.u32 %v1377, 7
      %v1379 = vsub.s32 %v1376, %v1378
      %v1380 = vrot.slane %v1364, %v1379
      %v1382 = vunpack.c.l.s4 1966171168
      %v1383 = vunpack.c.0.s8 %v1382
      %v1384 = vlaneseq
      %v1385 = vshrl.u32 %v1384, 7
      %v1386 = vsub.s32 %v1383, %v1385
      %v1387 = vrot.slane %v1365, %v1386
      %v1389 = vunpack.c.l.s4 1966171168
      %v1390 = vunpack.c.0.s8 %v1389
      %v1391 = vlaneseq
      %v1392 = vshrl.u32 %v1391, 7
      %v1393 = vsub.s32 %v1390, %v1392
      %v1394 = vrot.slane %v1366, %v1393
      %v1395 = vcombine.low %v1373, %v1380
      %v1396 = vcombine.low %v1387, %v1394
      %v1398 = vunpack.c.l.s4 1966171168
      %v1399 = vunpack.c.0.s8 %v1398
      %v1400 = vlaneseq
      %v1401 = vshrl.u32 %v1400, 7
      %v1402 = vsub.s32 %v1399, %v1401
      %v1403 = vrot.slane %v1395, %v1402
      %v1405 = vunpack.c.l.s4 1966171168
      %v1406 = vunpack.c.0.s8 %v1405
      %v1407 = vlaneseq
      %v1408 = vshrl.u32 %v1407, 7
      %v1409 = vsub.s32 %v1406, %v1408
      %v1410 = vrot.slane %v1396, %v1409
      %v1411 = vcombine.low %v1403, %v1410
      %v1412 = vcombine.low %v1299, %v1313
      %v1414 = vunpack.c.l.s4 1966171168
      %v1415 = vunpack.c.0.s8 %v1414
      %v1416 = vlaneseq
      %v1417 = vshrl.u32 %v1416, 7
      %v1418 = vsub.s32 %v1415, %v1417
      %v1419 = vrot.slane %v1412, %v1418
      %v1421 = vunpack.c.l.s4 1966171168
      %v1422 = vunpack.c.0.s8 %v1421
      %v1423 = vlaneseq
      %v1424 = vshrl.u32 %v1423, 7
      %v1425 = vsub.s32 %v1422, %v1424
      %v1426 = vrot.slane %v1419, %v1425
      %v1427 = vsel %vm783, %v1362, 0
      %v1429 = vsel %vm783, %v1411, 0
      %v1431 = vsel %vm783, %v1426, 0
      %1433 = vmatprep.subr.mxu0 0.0
      %1434 = vmatpush1.msra.mxu0 0.0
      %1435 = vmatprep.subr.mxu0 0.0
      %1436 = vmatpush1.msra.mxu0 0.0
      %1437 = vmatprep.subr.mxu0 0.0
      %1438 = vmatpush1.msra.mxu0 0.0
      %1439 = vmatprep.subr.mxu0 0.0
      %1440 = vmatpush1.msra.mxu0 0.0
      %1441 = vmatprep.subr.mxu0 0.0
      %1442 = vmatpush1.msra.mxu0 0.0
      %1443 = vmatprep.subr.mxu0 0.0
      %1444 = vmatpush1.msra.mxu0 0.0
      %1445 = vmatprep.subr.mxu0 0.0
      %1446 = vmatpush1.msra.mxu0 0.0
      %1447 = vmatprep.subr.mxu0 0.0
      %1448 = vmatpush1.msra.mxu0 0.0
      %1449 = vmatprep.subr.mxu0 0.0
      %1450 = vmatpush1.msra.mxu0 0.0
      %1451 = vmatprep.subr.mxu0 0.0
      %1452 = vmatpush1.msra.mxu0 0.0
      %1453 = vmatprep.subr.mxu0 0.0
      %1454 = vmatpush1.msra.mxu0 0.0
      %1455 = vmatprep.subr.mxu0 0.0
      %1456 = vmatpush1.msra.mxu0 0.0
      %1457 = vmatprep.subr.mxu0 0.0
      %1458 = vmatpush1.msra.mxu0 0.0
      %1459 = vmatprep.subr.mxu0 0.0
      %1460 = vmatpush1.msra.mxu0 0.0
      %1461 = vmatprep.subr.mxu0 0.0
      %1462 = vmatpush1.msra.mxu0 0.0
      %1463 = vmatprep.subr.mxu0 0.0
      %1464 = vmatpush1.msra.mxu0 %v406
      %1465 = vmatprep.subr.mxu0 0.0
      %1466 = vmatpush2.msra.mxu0 0.0
      %1467 = vmatprep.subr.mxu0 0.0
      %1468 = vmatpush2.msra.mxu0 0.0
      %1469 = vmatprep.subr.mxu0 0.0
      %1470 = vmatpush2.msra.mxu0 0.0
      %1471 = vmatprep.subr.mxu0 0.0
      %1472 = vmatpush2.msra.mxu0 0.0
      %1473 = vmatprep.subr.mxu0 0.0
      %1474 = vmatpush2.msra.mxu0 0.0
      %1475 = vmatprep.subr.mxu0 0.0
      %1476 = vmatpush2.msra.mxu0 0.0
      %1477 = vmatprep.subr.mxu0 0.0
      %1478 = vmatpush2.msra.mxu0 0.0
      %1479 = vmatprep.subr.mxu0 0.0
      %1480 = vmatpush2.msra.mxu0 0.0
      %1481 = vmatprep.subr.mxu0 0.0
      %1482 = vmatpush2.msra.mxu0 0.0
      %1483 = vmatprep.subr.mxu0 0.0
      %1484 = vmatpush2.msra.mxu0 0.0
      %1485 = vmatprep.subr.mxu0 0.0
      %1486 = vmatpush2.msra.mxu0 0.0
      %1487 = vmatprep.subr.mxu0 0.0
      %1488 = vmatpush2.msra.mxu0 0.0
      %1489 = vmatprep.subr.mxu0 0.0
      %1490 = vmatpush2.msra.mxu0 0.0
      %1491 = vmatprep.subr.mxu0 0.0
      %1492 = vmatpush2.msra.mxu0 0.0
      %1493 = vmatprep.subr.mxu0 0.0
      %1494 = vmatpush2.msra.mxu0 0.0
      %1495 = vmatprep.subr.mxu0 0.0
      %1496 = vmatpush2.msra.mxu0 0.0
      %1497 = vmatprep.mubr.f32.mxu0 0.0
      %1498 = vmatmul.mubr.f32.gmra.mxu0 %v1427
      %v1499 = vpop.f32.mrf.mxu0
      %v1500 = vadd.f32 0.0, %v1499
      %v1501 = vpop.f32.mrf.mxu0
      %1502 = vmatprep.mubr.f32.mxu0 0.0
      %1503 = vmatmul.mubr.f32.gmra.mxu0 %v1429
      %v1504 = vpop.f32.mrf.mxu0
      %v1505 = vadd.f32 0.0, %v1504
      %v1506 = vpop.f32.mrf.mxu0
      %1507 = vmatprep.mubr.f32.mxu0 0.0
      %1508 = vmatmul.mubr.f32.gmra.mxu0 %v1431
      %v1509 = vpop.f32.mrf.mxu0
      %v1510 = vadd.f32 0.0, %v1509
      %v1511 = vpop.f32.mrf.mxu0
      %1512 = vdwg.mxu0
      %v1513 = vadd.f32 %v1056, %v1500
      %v1514 = vadd.f32 %v1061, %v1505
      %v1515 = vadd.f32 %v1066, %v1510
      %v1516 = vsel %vm1069, %v1362, 0
      %v1518 = vsel %vm1069, %v1411, 0
      %v1520 = vsel %vm1069, %v1426, 0
      %v1523 = vsel %vm1076, %v409, 0
      %1525 = vmatprep.subr.mxu0 0.0
      %1526 = vmatpush1.msra.mxu0 0.0
      %1527 = vmatprep.subr.mxu0 0.0
      %1528 = vmatpush1.msra.mxu0 0.0
      %1529 = vmatprep.subr.mxu0 0.0
      %1530 = vmatpush1.msra.mxu0 0.0
      %1531 = vmatprep.subr.mxu0 0.0
      %1532 = vmatpush1.msra.mxu0 0.0
      %1533 = vmatprep.subr.mxu0 0.0
      %1534 = vmatpush1.msra.mxu0 0.0
      %1535 = vmatprep.subr.mxu0 0.0
      %1536 = vmatpush1.msra.mxu0 0.0
      %1537 = vmatprep.subr.mxu0 0.0
      %1538 = vmatpush1.msra.mxu0 0.0
      %1539 = vmatprep.subr.mxu0 0.0
      %1540 = vmatpush1.msra.mxu0 0.0
      %1541 = vmatprep.subr.mxu0 0.0
      %1542 = vmatpush1.msra.mxu0 0.0
      %1543 = vmatprep.subr.mxu0 0.0
      %1544 = vmatpush1.msra.mxu0 0.0
      %1545 = vmatprep.subr.mxu0 0.0
      %1546 = vmatpush1.msra.mxu0 0.0
      %1547 = vmatprep.subr.mxu0 0.0
      %1548 = vmatpush1.msra.mxu0 0.0
      %1549 = vmatprep.subr.mxu0 0.0
      %1550 = vmatpush1.msra.mxu0 0.0
      %1551 = vmatprep.subr.mxu0 0.0
      %1552 = vmatpush1.msra.mxu0 0.0
      %1553 = vmatprep.subr.mxu0 0.0
      %1554 = vmatpush1.msra.mxu0 0.0
      %1555 = vmatprep.subr.mxu0 0.0
      %1556 = vmatpush1.msra.mxu0 %v1523
      %1557 = vmatprep.subr.mxu0 0.0
      %1558 = vmatpush2.msra.mxu0 0.0
      %1559 = vmatprep.subr.mxu0 0.0
      %1560 = vmatpush2.msra.mxu0 0.0
      %1561 = vmatprep.subr.mxu0 0.0
      %1562 = vmatpush2.msra.mxu0 0.0
      %1563 = vmatprep.subr.mxu0 0.0
      %1564 = vmatpush2.msra.mxu0 0.0
      %1565 = vmatprep.subr.mxu0 0.0
      %1566 = vmatpush2.msra.mxu0 0.0
      %1567 = vmatprep.subr.mxu0 0.0
      %1568 = vmatpush2.msra.mxu0 0.0
      %1569 = vmatprep.subr.mxu0 0.0
      %1570 = vmatpush2.msra.mxu0 0.0
      %1571 = vmatprep.subr.mxu0 0.0
      %1572 = vmatpush2.msra.mxu0 0.0
      %1573 = vmatprep.subr.mxu0 0.0
      %1574 = vmatpush2.msra.mxu0 0.0
      %1575 = vmatprep.subr.mxu0 0.0
      %1576 = vmatpush2.msra.mxu0 0.0
      %1577 = vmatprep.subr.mxu0 0.0
      %1578 = vmatpush2.msra.mxu0 0.0
      %1579 = vmatprep.subr.mxu0 0.0
      %1580 = vmatpush2.msra.mxu0 0.0
      %1581 = vmatprep.subr.mxu0 0.0
      %1582 = vmatpush2.msra.mxu0 0.0
      %1583 = vmatprep.subr.mxu0 0.0
      %1584 = vmatpush2.msra.mxu0 0.0
      %1585 = vmatprep.subr.mxu0 0.0
      %1586 = vmatpush2.msra.mxu0 0.0
      %1587 = vmatprep.subr.mxu0 0.0
      %1588 = vmatpush2.msra.mxu0 0.0
      %1589 = vmatprep.mubr.f32.mxu0 0.0
      %1590 = vmatmul.mubr.f32.gmra.mxu0 %v1516
      %v1591 = vpop.f32.mrf.mxu0
      %v1592 = vadd.f32 0.0, %v1591
      %v1593 = vpop.f32.mrf.mxu0
      %1594 = vmatprep.mubr.f32.mxu0 0.0
      %1595 = vmatmul.mubr.f32.gmra.mxu0 %v1518
      %v1596 = vpop.f32.mrf.mxu0
      %v1597 = vadd.f32 0.0, %v1596
      %v1598 = vpop.f32.mrf.mxu0
      %1599 = vmatprep.mubr.f32.mxu0 0.0
      %1600 = vmatmul.mubr.f32.gmra.mxu0 %v1520
      %v1601 = vpop.f32.mrf.mxu0
      %v1602 = vadd.f32 0.0, %v1601
      %v1603 = vpop.f32.mrf.mxu0
      %1604 = vdwg.mxu0
      %v1605 = vadd.f32 %v1236, %v1592
      %v1606 = vadd.f32 %v1241, %v1597
      %v1607 = vadd.f32 %v1246, %v1602
      %v1611 = vcombine.high %v1513, %v1513
      %v1613 = vunpack.c.l.s4 1966171168
      %v1614 = vunpack.c.0.s8 %v1613
      %v1615 = vlaneseq
      %v1616 = vshrl.u32 %v1615, 7
      %v1617 = vsub.s32 %v1614, %v1616
      %v1618 = vrot.slane %v1513, %v1617
      %v1620 = vunpack.c.l.s4 1966171168
      %v1621 = vunpack.c.0.s8 %v1620
      %v1622 = vlaneseq
      %v1623 = vshrl.u32 %v1622, 7
      %v1624 = vsub.s32 %v1621, %v1623
      %v1625 = vrot.slane %v1611, %v1624
      %v1626 = vcombine.high %v1618, %v1618
      %v1627 = vcombine.high %v1625, %v1625
      %v1629 = vunpack.c.l.s4 1966171168
      %v1630 = vunpack.c.0.s8 %v1629
      %v1631 = vlaneseq
      %v1632 = vshrl.u32 %v1631, 7
      %v1633 = vsub.s32 %v1630, %v1632
      %v1634 = vrot.slane %v1618, %v1633
      %v1636 = vunpack.c.l.s4 1966171168
      %v1637 = vunpack.c.0.s8 %v1636
      %v1638 = vlaneseq
      %v1639 = vshrl.u32 %v1638, 7
      %v1640 = vsub.s32 %v1637, %v1639
      %v1641 = vrot.slane %v1625, %v1640
      %v1643 = vunpack.c.l.s4 1966171168
      %v1644 = vunpack.c.0.s8 %v1643
      %v1645 = vlaneseq
      %v1646 = vshrl.u32 %v1645, 7
      %v1647 = vsub.s32 %v1644, %v1646
      %v1648 = vrot.slane %v1626, %v1647
      %v1650 = vunpack.c.l.s4 1966171168
      %v1651 = vunpack.c.0.s8 %v1650
      %v1652 = vlaneseq
      %v1653 = vshrl.u32 %v1652, 7
      %v1654 = vsub.s32 %v1651, %v1653
      %v1655 = vrot.slane %v1627, %v1654
      %v1656 = vcombine.high %v1634, %v1634
      %v1657 = vcombine.high %v1641, %v1641
      %v1658 = vcombine.high %v1648, %v1648
      %v1659 = vcombine.high %v1655, %v1655
      %v1660 = vcombine.high %v1514, %v1514
      %v1662 = vunpack.c.l.s4 1966171168
      %v1663 = vunpack.c.0.s8 %v1662
      %v1664 = vlaneseq
      %v1665 = vshrl.u32 %v1664, 7
      %v1666 = vsub.s32 %v1663, %v1665
      %v1667 = vrot.slane %v1514, %v1666
      %v1669 = vunpack.c.l.s4 1966171168
      %v1670 = vunpack.c.0.s8 %v1669
      %v1671 = vlaneseq
      %v1672 = vshrl.u32 %v1671, 7
      %v1673 = vsub.s32 %v1670, %v1672
      %v1674 = vrot.slane %v1660, %v1673
      %v1675 = vcombine.high %v1667, %v1667
      %v1676 = vcombine.high %v1674, %v1674
      %v1678 = vunpack.c.l.s4 1966171168
      %v1679 = vunpack.c.0.s8 %v1678
      %v1680 = vlaneseq
      %v1681 = vshrl.u32 %v1680, 7
      %v1682 = vsub.s32 %v1679, %v1681
      %v1683 = vrot.slane %v1667, %v1682
      %v1685 = vunpack.c.l.s4 1966171168
      %v1686 = vunpack.c.0.s8 %v1685
      %v1687 = vlaneseq
      %v1688 = vshrl.u32 %v1687, 7
      %v1689 = vsub.s32 %v1686, %v1688
      %v1690 = vrot.slane %v1674, %v1689
      %v1692 = vunpack.c.l.s4 1966171168
      %v1693 = vunpack.c.0.s8 %v1692
      %v1694 = vlaneseq
      %v1695 = vshrl.u32 %v1694, 7
      %v1696 = vsub.s32 %v1693, %v1695
      %v1697 = vrot.slane %v1675, %v1696
      %v1699 = vunpack.c.l.s4 1966171168
      %v1700 = vunpack.c.0.s8 %v1699
      %v1701 = vlaneseq
      %v1702 = vshrl.u32 %v1701, 7
      %v1703 = vsub.s32 %v1700, %v1702
      %v1704 = vrot.slane %v1676, %v1703
      %v1705 = vcombine.high %v1683, %v1683
      %v1706 = vcombine.high %v1690, %v1690
      %v1707 = vcombine.high %v1697, %v1697
      %v1708 = vcombine.high %v1704, %v1704
      %v1710 = vunpack.c.l.s4 1966171168
      %v1711 = vunpack.c.0.s8 %v1710
      %v1712 = vlaneseq
      %v1713 = vshrl.u32 %v1712, 7
      %v1714 = vsub.s32 %v1711, %v1713
      %v1715 = vrot.slane %v1515, %v1714
      %v1717 = vunpack.c.l.s4 1966171168
      %v1718 = vunpack.c.0.s8 %v1717
      %v1719 = vlaneseq
      %v1720 = vshrl.u32 %v1719, 7
      %v1721 = vsub.s32 %v1718, %v1720
      %v1722 = vrot.slane %v1715, %v1721
      %v1742 = vcombine.high %v1605, %v1605
      %v1744 = vunpack.c.l.s4 1966171168
      %v1745 = vunpack.c.0.s8 %v1744
      %v1746 = vlaneseq
      %v1747 = vshrl.u32 %v1746, 7
      %v1748 = vsub.s32 %v1745, %v1747
      %v1749 = vrot.slane %v1605, %v1748
      %v1751 = vunpack.c.l.s4 1966171168
      %v1752 = vunpack.c.0.s8 %v1751
      %v1753 = vlaneseq
      %v1754 = vshrl.u32 %v1753, 7
      %v1755 = vsub.s32 %v1752, %v1754
      %v1756 = vrot.slane %v1742, %v1755
      %v1757 = vcombine.high %v1749, %v1749
      %v1758 = vcombine.high %v1756, %v1756
      %v1760 = vunpack.c.l.s4 1966171168
      %v1761 = vunpack.c.0.s8 %v1760
      %v1762 = vlaneseq
      %v1763 = vshrl.u32 %v1762, 7
      %v1764 = vsub.s32 %v1761, %v1763
      %v1765 = vrot.slane %v1749, %v1764
      %v1767 = vunpack.c.l.s4 1966171168
      %v1768 = vunpack.c.0.s8 %v1767
      %v1769 = vlaneseq
      %v1770 = vshrl.u32 %v1769, 7
      %v1771 = vsub.s32 %v1768, %v1770
      %v1772 = vrot.slane %v1756, %v1771
      %v1774 = vunpack.c.l.s4 1966171168
      %v1775 = vunpack.c.0.s8 %v1774
      %v1776 = vlaneseq
      %v1777 = vshrl.u32 %v1776, 7
      %v1778 = vsub.s32 %v1775, %v1777
      %v1779 = vrot.slane %v1757, %v1778
      %v1781 = vunpack.c.l.s4 1966171168
      %v1782 = vunpack.c.0.s8 %v1781
      %v1783 = vlaneseq
      %v1784 = vshrl.u32 %v1783, 7
      %v1785 = vsub.s32 %v1782, %v1784
      %v1786 = vrot.slane %v1758, %v1785
      %v1787 = vcombine.high %v1765, %v1765
      %v1788 = vcombine.high %v1772, %v1772
      %v1789 = vcombine.high %v1779, %v1779
      %v1790 = vcombine.high %v1786, %v1786
      %v1791 = vcombine.high %v1606, %v1606
      %v1793 = vunpack.c.l.s4 1966171168
      %v1794 = vunpack.c.0.s8 %v1793
      %v1795 = vlaneseq
      %v1796 = vshrl.u32 %v1795, 7
      %v1797 = vsub.s32 %v1794, %v1796
      %v1798 = vrot.slane %v1606, %v1797
      %v1800 = vunpack.c.l.s4 1966171168
      %v1801 = vunpack.c.0.s8 %v1800
      %v1802 = vlaneseq
      %v1803 = vshrl.u32 %v1802, 7
      %v1804 = vsub.s32 %v1801, %v1803
      %v1805 = vrot.slane %v1791, %v1804
      %v1806 = vcombine.high %v1798, %v1798
      %v1807 = vcombine.high %v1805, %v1805
      %v1809 = vunpack.c.l.s4 1966171168
      %v1810 = vunpack.c.0.s8 %v1809
      %v1811 = vlaneseq
      %v1812 = vshrl.u32 %v1811, 7
      %v1813 = vsub.s32 %v1810, %v1812
      %v1814 = vrot.slane %v1798, %v1813
      %v1816 = vunpack.c.l.s4 1966171168
      %v1817 = vunpack.c.0.s8 %v1816
      %v1818 = vlaneseq
      %v1819 = vshrl.u32 %v1818, 7
      %v1820 = vsub.s32 %v1817, %v1819
      %v1821 = vrot.slane %v1805, %v1820
      %v1823 = vunpack.c.l.s4 1966171168
      %v1824 = vunpack.c.0.s8 %v1823
      %v1825 = vlaneseq
      %v1826 = vshrl.u32 %v1825, 7
      %v1827 = vsub.s32 %v1824, %v1826
      %v1828 = vrot.slane %v1806, %v1827
      %v1830 = vunpack.c.l.s4 1966171168
      %v1831 = vunpack.c.0.s8 %v1830
      %v1832 = vlaneseq
      %v1833 = vshrl.u32 %v1832, 7
      %v1834 = vsub.s32 %v1831, %v1833
      %v1835 = vrot.slane %v1807, %v1834
      %v1836 = vcombine.high %v1814, %v1814
      %v1837 = vcombine.high %v1821, %v1821
      %v1838 = vcombine.high %v1828, %v1828
      %v1839 = vcombine.high %v1835, %v1835
      %v1841 = vunpack.c.l.s4 1966171168
      %v1842 = vunpack.c.0.s8 %v1841
      %v1843 = vlaneseq
      %v1844 = vshrl.u32 %v1843, 7
      %v1845 = vsub.s32 %v1842, %v1844
      %v1846 = vrot.slane %v1607, %v1845
      %v1847 = vcombine.high %v1846, %v1846
      %v1849 = vunpack.c.l.s4 1966171168
      %v1850 = vunpack.c.0.s8 %v1849
      %v1851 = vlaneseq
      %v1852 = vshrl.u32 %v1851, 7
      %v1853 = vsub.s32 %v1850, %v1852
      %v1854 = vrot.slane %v1846, %v1853
      %v1856 = vunpack.c.l.s4 1966171168
      %v1857 = vunpack.c.0.s8 %v1856
      %v1858 = vlaneseq
      %v1859 = vshrl.u32 %v1858, 7
      %v1860 = vsub.s32 %v1857, %v1859
      %v1861 = vrot.slane %v1847, %v1860
      %v1878 = vadd.f32 %v1634, %v1779
      %v1879 = vadd.f32 %v1648, %v1787
      %v1880 = vadd.f32 %v1656, %v1789
      %v1881 = vadd.f32 %v1658, %v1772
      %v1882 = vadd.f32 %v1641, %v1786
      %v1883 = vadd.f32 %v1655, %v1788
      %v1884 = vadd.f32 %v1657, %v1790
      %v1885 = vadd.f32 %v1659, %v1814
      %v1886 = vadd.f32 %v1697, %v1836
      %v1887 = vadd.f32 %v1705, %v1838
      %v1888 = vadd.f32 %v1707, %v1821
      %v1889 = vadd.f32 %v1690, %v1835
      %v1890 = vadd.f32 %v1704, %v1837
      %v1891 = vadd.f32 %v1706, %v1839
      %v1892 = vadd.f32 %v1708, %v1854
      %v1893 = vadd.f32 %v1722, %v1861
      %v1894 = vld [vmem:[%s4] sm:$0x1]
      %v1896 = vlaneseq
      %v1897 = vshrl.u32 %v1896, 7
      %v1898 = vsub.s32 0, %v1897
      %v1899 = vrot.slane %v1894, %v1898
      %v1900 = vcombine.high %v1899, %v1899
      %v1902 = vunpack.c.l.s4 1966171168
      %v1903 = vunpack.c.0.s8 %v1902
      %v1904 = vlaneseq
      %v1905 = vshrl.u32 %v1904, 7
      %v1906 = vsub.s32 %v1903, %v1905
      %v1907 = vrot.slane %v1899, %v1906
      %v1909 = vunpack.c.l.s4 1966171168
      %v1910 = vunpack.c.0.s8 %v1909
      %v1911 = vlaneseq
      %v1912 = vshrl.u32 %v1911, 7
      %v1913 = vsub.s32 %v1910, %v1912
      %v1914 = vrot.slane %v1900, %v1913
      %v1915 = vcombine.high %v1907, %v1907
      %v1916 = vcombine.high %v1914, %v1914
      %v1918 = vunpack.c.l.s4 1966171168
      %v1919 = vunpack.c.0.s8 %v1918
      %v1920 = vlaneseq
      %v1921 = vshrl.u32 %v1920, 7
      %v1922 = vsub.s32 %v1919, %v1921
      %v1923 = vrot.slane %v1907, %v1922
      %v1925 = vunpack.c.l.s4 1966171168
      %v1926 = vunpack.c.0.s8 %v1925
      %v1927 = vlaneseq
      %v1928 = vshrl.u32 %v1927, 7
      %v1929 = vsub.s32 %v1926, %v1928
      %v1930 = vrot.slane %v1914, %v1929
      %v1932 = vunpack.c.l.s4 1966171168
      %v1933 = vunpack.c.0.s8 %v1932
      %v1934 = vlaneseq
      %v1935 = vshrl.u32 %v1934, 7
      %v1936 = vsub.s32 %v1933, %v1935
      %v1937 = vrot.slane %v1915, %v1936
      %v1939 = vunpack.c.l.s4 1966171168
      %v1940 = vunpack.c.0.s8 %v1939
      %v1941 = vlaneseq
      %v1942 = vshrl.u32 %v1941, 7
      %v1943 = vsub.s32 %v1940, %v1942
      %v1944 = vrot.slane %v1916, %v1943
      %v1945 = vcombine.high %v1923, %v1923
      %v1946 = vcombine.high %v1930, %v1930
      %v1947 = vcombine.high %v1937, %v1937
      %v1948 = vcombine.high %v1944, %v1944
      %v1957 = vadd.f32 %v1878, %v1923
      %v1958 = vadd.f32 %v1879, %v1937
      %v1959 = vadd.f32 %v1880, %v1945
      %v1960 = vadd.f32 %v1881, %v1947
      %v1961 = vadd.f32 %v1882, %v1930
      %v1962 = vadd.f32 %v1883, %v1944
      %v1963 = vadd.f32 %v1884, %v1946
      %v1964 = vadd.f32 %v1885, %v1948
      %v1965 = vadd.f32 %v1886, %v1923
      %v1966 = vadd.f32 %v1887, %v1937
      %v1967 = vadd.f32 %v1888, %v1945
      %v1968 = vadd.f32 %v1889, %v1947
      %v1969 = vadd.f32 %v1890, %v1930
      %v1970 = vadd.f32 %v1891, %v1944
      %v1971 = vadd.f32 %v1892, %v1946
      %v1972 = vadd.f32 %v1893, %v1948
      %v1989 = vcombine.low %v1957, %v1958
      %v1990 = vcombine.low %v1959, %v1960
      %v1991 = vcombine.low %v1961, %v1962
      %v1992 = vcombine.low %v1963, %v1964
      %v1994 = vunpack.c.l.s4 1966171168
      %v1995 = vunpack.c.0.s8 %v1994
      %v1996 = vlaneseq
      %v1997 = vshrl.u32 %v1996, 7
      %v1998 = vsub.s32 %v1995, %v1997
      %v1999 = vrot.slane %v1989, %v1998
      %v2001 = vunpack.c.l.s4 1966171168
      %v2002 = vunpack.c.0.s8 %v2001
      %v2003 = vlaneseq
      %v2004 = vshrl.u32 %v2003, 7
      %v2005 = vsub.s32 %v2002, %v2004
      %v2006 = vrot.slane %v1990, %v2005
      %v2008 = vunpack.c.l.s4 1966171168
      %v2009 = vunpack.c.0.s8 %v2008
      %v2010 = vlaneseq
      %v2011 = vshrl.u32 %v2010, 7
      %v2012 = vsub.s32 %v2009, %v2011
      %v2013 = vrot.slane %v1991, %v2012
      %v2015 = vunpack.c.l.s4 1966171168
      %v2016 = vunpack.c.0.s8 %v2015
      %v2017 = vlaneseq
      %v2018 = vshrl.u32 %v2017, 7
      %v2019 = vsub.s32 %v2016, %v2018
      %v2020 = vrot.slane %v1992, %v2019
      %v2021 = vcombine.low %v1999, %v2006
      %v2022 = vcombine.low %v2013, %v2020
      %v2024 = vunpack.c.l.s4 1966171168
      %v2025 = vunpack.c.0.s8 %v2024
      %v2026 = vlaneseq
      %v2027 = vshrl.u32 %v2026, 7
      %v2028 = vsub.s32 %v2025, %v2027
      %v2029 = vrot.slane %v2021, %v2028
      %v2031 = vunpack.c.l.s4 1966171168
      %v2032 = vunpack.c.0.s8 %v2031
      %v2033 = vlaneseq
      %v2034 = vshrl.u32 %v2033, 7
      %v2035 = vsub.s32 %v2032, %v2034
      %v2036 = vrot.slane %v2022, %v2035
      %v2037 = vcombine.low %v2029, %v2036
      %v2038 = vcombine.low %v1965, %v1966
      %v2039 = vcombine.low %v1967, %v1968
      %v2040 = vcombine.low %v1969, %v1970
      %v2041 = vcombine.low %v1971, %v1972
      %v2043 = vunpack.c.l.s4 1966171168
      %v2044 = vunpack.c.0.s8 %v2043
      %v2045 = vlaneseq
      %v2046 = vshrl.u32 %v2045, 7
      %v2047 = vsub.s32 %v2044, %v2046
      %v2048 = vrot.slane %v2038, %v2047
      %v2050 = vunpack.c.l.s4 1966171168
      %v2051 = vunpack.c.0.s8 %v2050
      %v2052 = vlaneseq
      %v2053 = vshrl.u32 %v2052, 7
      %v2054 = vsub.s32 %v2051, %v2053
      %v2055 = vrot.slane %v2039, %v2054
      %v2057 = vunpack.c.l.s4 1966171168
      %v2058 = vunpack.c.0.s8 %v2057
      %v2059 = vlaneseq
      %v2060 = vshrl.u32 %v2059, 7
      %v2061 = vsub.s32 %v2058, %v2060
      %v2062 = vrot.slane %v2040, %v2061
      %v2064 = vunpack.c.l.s4 1966171168
      %v2065 = vunpack.c.0.s8 %v2064
      %v2066 = vlaneseq
      %v2067 = vshrl.u32 %v2066, 7
      %v2068 = vsub.s32 %v2065, %v2067
      %v2069 = vrot.slane %v2041, %v2068
      %v2070 = vcombine.low %v2048, %v2055
      %v2071 = vcombine.low %v2062, %v2069
      %v2073 = vunpack.c.l.s4 1966171168
      %v2074 = vunpack.c.0.s8 %v2073
      %v2075 = vlaneseq
      %v2076 = vshrl.u32 %v2075, 7
      %v2077 = vsub.s32 %v2074, %v2076
      %v2078 = vrot.slane %v2070, %v2077
      %v2080 = vunpack.c.l.s4 1966171168
      %v2081 = vunpack.c.0.s8 %v2080
      %v2082 = vlaneseq
      %v2083 = vshrl.u32 %v2082, 7
      %v2084 = vsub.s32 %v2081, %v2083
      %v2085 = vrot.slane %v2071, %v2084
      %v2086 = vcombine.low %v2078, %v2085
      %v2089 = vsel %vm783, %v2037, 0.0
      %2090 = vadd.xlane.f32.xlu0 %v2089
      %v2091 = vpop.xlane.xlu0 %2090
      %v2092 = vsel %vm783, %v2086, 0.0
      %2093 = vadd.xlane.f32.xlu0 %v2092
      %v2094 = vpop.xlane.xlu0 %2093
      %v2095 = vrcp.pop 8.0
      %v2096 = vmul.f32 %v2091, %v2095
      %v2097 = vmul.f32 %v2094, %v2095
      %v2100 = vlaneseq
      %v2101 = vshrl.u32 %v2100, 7
      %v2102 = vsub.s32 0, %v2101
      %v2103 = vrot.slane %v2096, %v2102
      %v2104 = vlaneseq
      %v2105 = vshrl.u32 %v2104, 7
      %v2106 = vsub.s32 1, %v2105
      %v2107 = vrot.slane %v2096, %v2106
      %v2108 = vlaneseq
      %v2109 = vshrl.u32 %v2108, 7
      %v2110 = vsub.s32 2, %v2109
      %v2111 = vrot.slane %v2096, %v2110
      %v2112 = vlaneseq
      %v2113 = vshrl.u32 %v2112, 7
      %v2114 = vsub.s32 3, %v2113
      %v2115 = vrot.slane %v2096, %v2114
      %v2116 = vlaneseq
      %v2117 = vshrl.u32 %v2116, 7
      %v2118 = vsub.s32 4, %v2117
      %v2119 = vrot.slane %v2096, %v2118
      %v2120 = vlaneseq
      %v2121 = vshrl.u32 %v2120, 7
      %v2122 = vsub.s32 5, %v2121
      %v2123 = vrot.slane %v2096, %v2122
      %v2124 = vlaneseq
      %v2125 = vshrl.u32 %v2124, 7
      %v2126 = vsub.s32 6, %v2125
      %v2127 = vrot.slane %v2096, %v2126
      %v2128 = vlaneseq
      %v2129 = vshrl.u32 %v2128, 7
      %v2130 = vsub.s32 7, %v2129
      %v2131 = vrot.slane %v2096, %v2130
      %v2132 = vlaneseq
      %v2133 = vshrl.u32 %v2132, 7
      %v2134 = vsub.s32 0, %v2133
      %v2135 = vrot.slane %v2097, %v2134
      %v2136 = vlaneseq
      %v2137 = vshrl.u32 %v2136, 7
      %v2138 = vsub.s32 1, %v2137
      %v2139 = vrot.slane %v2097, %v2138
      %v2140 = vlaneseq
      %v2141 = vshrl.u32 %v2140, 7
      %v2142 = vsub.s32 2, %v2141
      %v2143 = vrot.slane %v2097, %v2142
      %v2144 = vlaneseq
      %v2145 = vshrl.u32 %v2144, 7
      %v2146 = vsub.s32 3, %v2145
      %v2147 = vrot.slane %v2097, %v2146
      %v2148 = vlaneseq
      %v2149 = vshrl.u32 %v2148, 7
      %v2150 = vsub.s32 4, %v2149
      %v2151 = vrot.slane %v2097, %v2150
      %v2152 = vlaneseq
      %v2153 = vshrl.u32 %v2152, 7
      %v2154 = vsub.s32 5, %v2153
      %v2155 = vrot.slane %v2097, %v2154
      %v2156 = vlaneseq
      %v2157 = vshrl.u32 %v2156, 7
      %v2158 = vsub.s32 6, %v2157
      %v2159 = vrot.slane %v2097, %v2158
      %v2160 = vlaneseq
      %v2161 = vshrl.u32 %v2160, 7
      %v2162 = vsub.s32 7, %v2161
      %v2163 = vrot.slane %v2097, %v2162
      %v2180 = vsub.f32 %v1957, %v2103
      %v2181 = vsub.f32 %v1958, %v2107
      %v2182 = vsub.f32 %v1959, %v2111
      %v2183 = vsub.f32 %v1960, %v2115
      %v2184 = vsub.f32 %v1961, %v2119
      %v2185 = vsub.f32 %v1962, %v2123
      %v2186 = vsub.f32 %v1963, %v2127
      %v2187 = vsub.f32 %v1964, %v2131
      %v2188 = vsub.f32 %v1965, %v2135
      %v2189 = vsub.f32 %v1966, %v2139
      %v2190 = vsub.f32 %v1967, %v2143
      %v2191 = vsub.f32 %v1968, %v2147
      %v2192 = vsub.f32 %v1969, %v2151
      %v2193 = vsub.f32 %v1970, %v2155
      %v2194 = vsub.f32 %v1971, %v2159
      %v2195 = vsub.f32 %v1972, %v2163
      %v2196 = vmul.f32 %v2180, %v2180
      %v2197 = vmul.f32 %v2181, %v2181
      %v2198 = vmul.f32 %v2182, %v2182
      %v2199 = vmul.f32 %v2183, %v2183
      %v2200 = vmul.f32 %v2184, %v2184
      %v2201 = vmul.f32 %v2185, %v2185
      %v2202 = vmul.f32 %v2186, %v2186
      %v2203 = vmul.f32 %v2187, %v2187
      %v2204 = vmul.f32 %v2188, %v2188
      %v2205 = vmul.f32 %v2189, %v2189
      %v2206 = vmul.f32 %v2190, %v2190
      %v2207 = vmul.f32 %v2191, %v2191
      %v2208 = vmul.f32 %v2192, %v2192
      %v2209 = vmul.f32 %v2193, %v2193
      %v2210 = vmul.f32 %v2194, %v2194
      %v2211 = vmul.f32 %v2195, %v2195
      %v2228 = vcombine.low %v2196, %v2197
      %v2229 = vcombine.low %v2198, %v2199
      %v2230 = vcombine.low %v2200, %v2201
      %v2231 = vcombine.low %v2202, %v2203
      %v2233 = vunpack.c.l.s4 1966171168
      %v2234 = vunpack.c.0.s8 %v2233
      %v2235 = vlaneseq
      %v2236 = vshrl.u32 %v2235, 7
      %v2237 = vsub.s32 %v2234, %v2236
      %v2238 = vrot.slane %v2228, %v2237
      %v2240 = vunpack.c.l.s4 1966171168
      %v2241 = vunpack.c.0.s8 %v2240
      %v2242 = vlaneseq
      %v2243 = vshrl.u32 %v2242, 7
      %v2244 = vsub.s32 %v2241, %v2243
      %v2245 = vrot.slane %v2229, %v2244
      %v2247 = vunpack.c.l.s4 1966171168
      %v2248 = vunpack.c.0.s8 %v2247
      %v2249 = vlaneseq
      %v2250 = vshrl.u32 %v2249, 7
      %v2251 = vsub.s32 %v2248, %v2250
      %v2252 = vrot.slane %v2230, %v2251
      %v2254 = vunpack.c.l.s4 1966171168
      %v2255 = vunpack.c.0.s8 %v2254
      %v2256 = vlaneseq
      %v2257 = vshrl.u32 %v2256, 7
      %v2258 = vsub.s32 %v2255, %v2257
      %v2259 = vrot.slane %v2231, %v2258
      %v2260 = vcombine.low %v2238, %v2245
      %v2261 = vcombine.low %v2252, %v2259
      %v2263 = vunpack.c.l.s4 1966171168
      %v2264 = vunpack.c.0.s8 %v2263
      %v2265 = vlaneseq
      %v2266 = vshrl.u32 %v2265, 7
      %v2267 = vsub.s32 %v2264, %v2266
      %v2268 = vrot.slane %v2260, %v2267
      %v2270 = vunpack.c.l.s4 1966171168
      %v2271 = vunpack.c.0.s8 %v2270
      %v2272 = vlaneseq
      %v2273 = vshrl.u32 %v2272, 7
      %v2274 = vsub.s32 %v2271, %v2273
      %v2275 = vrot.slane %v2261, %v2274
      %v2276 = vcombine.low %v2268, %v2275
      %v2277 = vcombine.low %v2204, %v2205
      %v2278 = vcombine.low %v2206, %v2207
      %v2279 = vcombine.low %v2208, %v2209
      %v2280 = vcombine.low %v2210, %v2211
      %v2282 = vunpack.c.l.s4 1966171168
      %v2283 = vunpack.c.0.s8 %v2282
      %v2284 = vlaneseq
      %v2285 = vshrl.u32 %v2284, 7
      %v2286 = vsub.s32 %v2283, %v2285
      %v2287 = vrot.slane %v2277, %v2286
      %v2289 = vunpack.c.l.s4 1966171168
      %v2290 = vunpack.c.0.s8 %v2289
      %v2291 = vlaneseq
      %v2292 = vshrl.u32 %v2291, 7
      %v2293 = vsub.s32 %v2290, %v2292
      %v2294 = vrot.slane %v2278, %v2293
      %v2296 = vunpack.c.l.s4 1966171168
      %v2297 = vunpack.c.0.s8 %v2296
      %v2298 = vlaneseq
      %v2299 = vshrl.u32 %v2298, 7
      %v2300 = vsub.s32 %v2297, %v2299
      %v2301 = vrot.slane %v2279, %v2300
      %v2303 = vunpack.c.l.s4 1966171168
      %v2304 = vunpack.c.0.s8 %v2303
      %v2305 = vlaneseq
      %v2306 = vshrl.u32 %v2305, 7
      %v2307 = vsub.s32 %v2304, %v2306
      %v2308 = vrot.slane %v2280, %v2307
      %v2309 = vcombine.low %v2287, %v2294
      %v2310 = vcombine.low %v2301, %v2308
      %v2312 = vunpack.c.l.s4 1966171168
      %v2313 = vunpack.c.0.s8 %v2312
      %v2314 = vlaneseq
      %v2315 = vshrl.u32 %v2314, 7
      %v2316 = vsub.s32 %v2313, %v2315
      %v2317 = vrot.slane %v2309, %v2316
      %v2319 = vunpack.c.l.s4 1966171168
      %v2320 = vunpack.c.0.s8 %v2319
      %v2321 = vlaneseq
      %v2322 = vshrl.u32 %v2321, 7
      %v2323 = vsub.s32 %v2320, %v2322
      %v2324 = vrot.slane %v2310, %v2323
      %v2325 = vcombine.low %v2317, %v2324
      %v2328 = vsel %vm783, %v2276, 0.0
      %2329 = vadd.xlane.f32.xlu0 %v2328
      %v2330 = vpop.xlane.xlu0 %2329
      %v2331 = vsel %vm783, %v2325, 0.0
      %2332 = vadd.xlane.f32.xlu0 %v2331
      %v2333 = vpop.xlane.xlu0 %2332
      %v2334 = vmul.f32 %v2330, %v2095
      %v2335 = vmul.f32 %v2333, %v2095
      %v2336 = vadd.f32 %v2334, 1e-05
      %v2337 = vadd.f32 %v2335, 1e-05
      %v2338 = vrsqrt.pop %v2336
      %v2339 = vrsqrt.pop %v2337
      %v2342 = vlaneseq
      %v2343 = vshrl.u32 %v2342, 7
      %v2344 = vsub.s32 0, %v2343
      %v2345 = vrot.slane %v2338, %v2344
      %v2346 = vlaneseq
      %v2347 = vshrl.u32 %v2346, 7
      %v2348 = vsub.s32 1, %v2347
      %v2349 = vrot.slane %v2338, %v2348
      %v2350 = vlaneseq
      %v2351 = vshrl.u32 %v2350, 7
      %v2352 = vsub.s32 2, %v2351
      %v2353 = vrot.slane %v2338, %v2352
      %v2354 = vlaneseq
      %v2355 = vshrl.u32 %v2354, 7
      %v2356 = vsub.s32 3, %v2355
      %v2357 = vrot.slane %v2338, %v2356
      %v2358 = vlaneseq
      %v2359 = vshrl.u32 %v2358, 7
      %v2360 = vsub.s32 4, %v2359
      %v2361 = vrot.slane %v2338, %v2360
      %v2362 = vlaneseq
      %v2363 = vshrl.u32 %v2362, 7
      %v2364 = vsub.s32 5, %v2363
      %v2365 = vrot.slane %v2338, %v2364
      %v2366 = vlaneseq
      %v2367 = vshrl.u32 %v2366, 7
      %v2368 = vsub.s32 6, %v2367
      %v2369 = vrot.slane %v2338, %v2368
      %v2370 = vlaneseq
      %v2371 = vshrl.u32 %v2370, 7
      %v2372 = vsub.s32 7, %v2371
      %v2373 = vrot.slane %v2338, %v2372
      %v2374 = vlaneseq
      %v2375 = vshrl.u32 %v2374, 7
      %v2376 = vsub.s32 0, %v2375
      %v2377 = vrot.slane %v2339, %v2376
      %v2378 = vlaneseq
      %v2379 = vshrl.u32 %v2378, 7
      %v2380 = vsub.s32 1, %v2379
      %v2381 = vrot.slane %v2339, %v2380
      %v2382 = vlaneseq
      %v2383 = vshrl.u32 %v2382, 7
      %v2384 = vsub.s32 2, %v2383
      %v2385 = vrot.slane %v2339, %v2384
      %v2386 = vlaneseq
      %v2387 = vshrl.u32 %v2386, 7
      %v2388 = vsub.s32 3, %v2387
      %v2389 = vrot.slane %v2339, %v2388
      %v2390 = vlaneseq
      %v2391 = vshrl.u32 %v2390, 7
      %v2392 = vsub.s32 4, %v2391
      %v2393 = vrot.slane %v2339, %v2392
      %v2394 = vlaneseq
      %v2395 = vshrl.u32 %v2394, 7
      %v2396 = vsub.s32 5, %v2395
      %v2397 = vrot.slane %v2339, %v2396
      %v2398 = vlaneseq
      %v2399 = vshrl.u32 %v2398, 7
      %v2400 = vsub.s32 6, %v2399
      %v2401 = vrot.slane %v2339, %v2400
      %v2402 = vlaneseq
      %v2403 = vshrl.u32 %v2402, 7
      %v2404 = vsub.s32 7, %v2403
      %v2405 = vrot.slane %v2339, %v2404
      %v2422 = vmul.f32 %v2180, %v2345
      %v2423 = vmul.f32 %v2181, %v2349
      %v2424 = vmul.f32 %v2182, %v2353
      %v2425 = vmul.f32 %v2183, %v2357
      %v2426 = vmul.f32 %v2184, %v2361
      %v2427 = vmul.f32 %v2185, %v2365
      %v2428 = vmul.f32 %v2186, %v2369
      %v2429 = vmul.f32 %v2187, %v2373
      %v2430 = vmul.f32 %v2188, %v2377
      %v2431 = vmul.f32 %v2189, %v2381
      %v2432 = vmul.f32 %v2190, %v2385
      %v2433 = vmul.f32 %v2191, %v2389
      %v2434 = vmul.f32 %v2192, %v2393
      %v2435 = vmul.f32 %v2193, %v2397
      %v2436 = vmul.f32 %v2194, %v2401
      %v2437 = vmul.f32 %v2195, %v2405
      %v2438 = vld [vmem:[%s5] sm:$0x1]
      %v2440 = vlaneseq
      %v2441 = vshrl.u32 %v2440, 7
      %v2442 = vsub.s32 0, %v2441
      %v2443 = vrot.slane %v2438, %v2442
      %v2444 = vcombine.high %v2443, %v2443
      %v2446 = vunpack.c.l.s4 1966171168
      %v2447 = vunpack.c.0.s8 %v2446
      %v2448 = vlaneseq
      %v2449 = vshrl.u32 %v2448, 7
      %v2450 = vsub.s32 %v2447, %v2449
      %v2451 = vrot.slane %v2443, %v2450
      %v2453 = vunpack.c.l.s4 1966171168
      %v2454 = vunpack.c.0.s8 %v2453
      %v2455 = vlaneseq
      %v2456 = vshrl.u32 %v2455, 7
      %v2457 = vsub.s32 %v2454, %v2456
      %v2458 = vrot.slane %v2444, %v2457
      %v2459 = vcombine.high %v2451, %v2451
      %v2460 = vcombine.high %v2458, %v2458
      %v2462 = vunpack.c.l.s4 1966171168
      %v2463 = vunpack.c.0.s8 %v2462
      %v2464 = vlaneseq
      %v2465 = vshrl.u32 %v2464, 7
      %v2466 = vsub.s32 %v2463, %v2465
      %v2467 = vrot.slane %v2451, %v2466
      %v2469 = vunpack.c.l.s4 1966171168
      %v2470 = vunpack.c.0.s8 %v2469
      %v2471 = vlaneseq
      %v2472 = vshrl.u32 %v2471, 7
      %v2473 = vsub.s32 %v2470, %v2472
      %v2474 = vrot.slane %v2458, %v2473
      %v2476 = vunpack.c.l.s4 1966171168
      %v2477 = vunpack.c.0.s8 %v2476
      %v2478 = vlaneseq
      %v2479 = vshrl.u32 %v2478, 7
      %v2480 = vsub.s32 %v2477, %v2479
      %v2481 = vrot.slane %v2459, %v2480
      %v2483 = vunpack.c.l.s4 1966171168
      %v2484 = vunpack.c.0.s8 %v2483
      %v2485 = vlaneseq
      %v2486 = vshrl.u32 %v2485, 7
      %v2487 = vsub.s32 %v2484, %v2486
      %v2488 = vrot.slane %v2460, %v2487
      %v2489 = vcombine.high %v2467, %v2467
      %v2490 = vcombine.high %v2474, %v2474
      %v2491 = vcombine.high %v2481, %v2481
      %v2492 = vcombine.high %v2488, %v2488
      %v2501 = vmul.f32 %v2422, %v2467
      %v2502 = vmul.f32 %v2423, %v2481
      %v2503 = vmul.f32 %v2424, %v2489
      %v2504 = vmul.f32 %v2425, %v2491
      %v2505 = vmul.f32 %v2426, %v2474
      %v2506 = vmul.f32 %v2427, %v2488
      %v2507 = vmul.f32 %v2428, %v2490
      %v2508 = vmul.f32 %v2429, %v2492
      %v2509 = vmul.f32 %v2430, %v2467
      %v2510 = vmul.f32 %v2431, %v2481
      %v2511 = vmul.f32 %v2432, %v2489
      %v2512 = vmul.f32 %v2433, %v2491
      %v2513 = vmul.f32 %v2434, %v2474
      %v2514 = vmul.f32 %v2435, %v2488
      %v2515 = vmul.f32 %v2436, %v2490
      %v2516 = vmul.f32 %v2437, %v2492
      %v2517 = vld [vmem:[%s6] sm:$0x1]
      %v2519 = vlaneseq
      %v2520 = vshrl.u32 %v2519, 7
      %v2521 = vsub.s32 0, %v2520
      %v2522 = vrot.slane %v2517, %v2521
      %v2523 = vcombine.high %v2522, %v2522
      %v2525 = vunpack.c.l.s4 1966171168
      %v2526 = vunpack.c.0.s8 %v2525
      %v2527 = vlaneseq
      %v2528 = vshrl.u32 %v2527, 7
      %v2529 = vsub.s32 %v2526, %v2528
      %v2530 = vrot.slane %v2522, %v2529
      %v2532 = vunpack.c.l.s4 1966171168
      %v2533 = vunpack.c.0.s8 %v2532
      %v2534 = vlaneseq
      %v2535 = vshrl.u32 %v2534, 7
      %v2536 = vsub.s32 %v2533, %v2535
      %v2537 = vrot.slane %v2523, %v2536
      %v2538 = vcombine.high %v2530, %v2530
      %v2539 = vcombine.high %v2537, %v2537
      %v2541 = vunpack.c.l.s4 1966171168
      %v2542 = vunpack.c.0.s8 %v2541
      %v2543 = vlaneseq
      %v2544 = vshrl.u32 %v2543, 7
      %v2545 = vsub.s32 %v2542, %v2544
      %v2546 = vrot.slane %v2530, %v2545
      %v2548 = vunpack.c.l.s4 1966171168
      %v2549 = vunpack.c.0.s8 %v2548
      %v2550 = vlaneseq
      %v2551 = vshrl.u32 %v2550, 7
      %v2552 = vsub.s32 %v2549, %v2551
      %v2553 = vrot.slane %v2537, %v2552
      %v2555 = vunpack.c.l.s4 1966171168
      %v2556 = vunpack.c.0.s8 %v2555
      %v2557 = vlaneseq
      %v2558 = vshrl.u32 %v2557, 7
      %v2559 = vsub.s32 %v2556, %v2558
      %v2560 = vrot.slane %v2538, %v2559
      %v2562 = vunpack.c.l.s4 1966171168
      %v2563 = vunpack.c.0.s8 %v2562
      %v2564 = vlaneseq
      %v2565 = vshrl.u32 %v2564, 7
      %v2566 = vsub.s32 %v2563, %v2565
      %v2567 = vrot.slane %v2539, %v2566
      %v2568 = vcombine.high %v2546, %v2546
      %v2569 = vcombine.high %v2553, %v2553
      %v2570 = vcombine.high %v2560, %v2560
      %v2571 = vcombine.high %v2567, %v2567
      %v2580 = vadd.f32 %v2501, %v2546
      %v2581 = vadd.f32 %v2502, %v2560
      %v2582 = vadd.f32 %v2503, %v2568
      %v2583 = vadd.f32 %v2504, %v2570
      %v2584 = vadd.f32 %v2505, %v2553
      %v2585 = vadd.f32 %v2506, %v2567
      %v2586 = vadd.f32 %v2507, %v2569
      %v2587 = vadd.f32 %v2508, %v2571
      %v2588 = vadd.f32 %v2509, %v2546
      %v2589 = vadd.f32 %v2510, %v2560
      %v2590 = vadd.f32 %v2511, %v2568
      %v2591 = vadd.f32 %v2512, %v2570
      %v2592 = vadd.f32 %v2513, %v2553
      %v2593 = vadd.f32 %v2514, %v2567
      %v2594 = vadd.f32 %v2515, %v2569
      %v2595 = vadd.f32 %v2516, %v2571
      %v2612 = vcombine.low %v2580, %v2581
      %v2613 = vcombine.low %v2582, %v2583
      %v2614 = vcombine.low %v2584, %v2585
      %v2615 = vcombine.low %v2586, %v2587
      %v2617 = vunpack.c.l.s4 1966171168
      %v2618 = vunpack.c.0.s8 %v2617
      %v2619 = vlaneseq
      %v2620 = vshrl.u32 %v2619, 7
      %v2621 = vsub.s32 %v2618, %v2620
      %v2622 = vrot.slane %v2612, %v2621
      %v2624 = vunpack.c.l.s4 1966171168
      %v2625 = vunpack.c.0.s8 %v2624
      %v2626 = vlaneseq
      %v2627 = vshrl.u32 %v2626, 7
      %v2628 = vsub.s32 %v2625, %v2627
      %v2629 = vrot.slane %v2613, %v2628
      %v2631 = vunpack.c.l.s4 1966171168
      %v2632 = vunpack.c.0.s8 %v2631
      %v2633 = vlaneseq
      %v2634 = vshrl.u32 %v2633, 7
      %v2635 = vsub.s32 %v2632, %v2634
      %v2636 = vrot.slane %v2614, %v2635
      %v2638 = vunpack.c.l.s4 1966171168
      %v2639 = vunpack.c.0.s8 %v2638
      %v2640 = vlaneseq
      %v2641 = vshrl.u32 %v2640, 7
      %v2642 = vsub.s32 %v2639, %v2641
      %v2643 = vrot.slane %v2615, %v2642
      %v2644 = vcombine.low %v2622, %v2629
      %v2645 = vcombine.low %v2636, %v2643
      %v2647 = vunpack.c.l.s4 1966171168
      %v2648 = vunpack.c.0.s8 %v2647
      %v2649 = vlaneseq
      %v2650 = vshrl.u32 %v2649, 7
      %v2651 = vsub.s32 %v2648, %v2650
      %v2652 = vrot.slane %v2644, %v2651
      %v2654 = vunpack.c.l.s4 1966171168
      %v2655 = vunpack.c.0.s8 %v2654
      %v2656 = vlaneseq
      %v2657 = vshrl.u32 %v2656, 7
      %v2658 = vsub.s32 %v2655, %v2657
      %v2659 = vrot.slane %v2645, %v2658
      %v2660 = vcombine.low %v2652, %v2659
      %v2661 = vcombine.low %v2588, %v2589
      %v2662 = vcombine.low %v2590, %v2591
      %v2663 = vcombine.low %v2592, %v2593
      %v2664 = vcombine.low %v2594, %v2595
      %v2666 = vunpack.c.l.s4 1966171168
      %v2667 = vunpack.c.0.s8 %v2666
      %v2668 = vlaneseq
      %v2669 = vshrl.u32 %v2668, 7
      %v2670 = vsub.s32 %v2667, %v2669
      %v2671 = vrot.slane %v2661, %v2670
      %v2673 = vunpack.c.l.s4 1966171168
      %v2674 = vunpack.c.0.s8 %v2673
      %v2675 = vlaneseq
      %v2676 = vshrl.u32 %v2675, 7
      %v2677 = vsub.s32 %v2674, %v2676
      %v2678 = vrot.slane %v2662, %v2677
      %v2680 = vunpack.c.l.s4 1966171168
      %v2681 = vunpack.c.0.s8 %v2680
      %v2682 = vlaneseq
      %v2683 = vshrl.u32 %v2682, 7
      %v2684 = vsub.s32 %v2681, %v2683
      %v2685 = vrot.slane %v2663, %v2684
      %v2687 = vunpack.c.l.s4 1966171168
      %v2688 = vunpack.c.0.s8 %v2687
      %v2689 = vlaneseq
      %v2690 = vshrl.u32 %v2689, 7
      %v2691 = vsub.s32 %v2688, %v2690
      %v2692 = vrot.slane %v2664, %v2691
      %v2693 = vcombine.low %v2671, %v2678
      %v2694 = vcombine.low %v2685, %v2692
      %v2696 = vunpack.c.l.s4 1966171168
      %v2697 = vunpack.c.0.s8 %v2696
      %v2698 = vlaneseq
      %v2699 = vshrl.u32 %v2698, 7
      %v2700 = vsub.s32 %v2697, %v2699
      %v2701 = vrot.slane %v2693, %v2700
      %v2703 = vunpack.c.l.s4 1966171168
      %v2704 = vunpack.c.0.s8 %v2703
      %v2705 = vlaneseq
      %v2706 = vshrl.u32 %v2705, 7
      %v2707 = vsub.s32 %v2704, %v2706
      %v2708 = vrot.slane %v2694, %v2707
      %v2709 = vcombine.low %v2701, %v2708
      %2712 = vst.msk [vmem:[%s392] sm:$0xff] %vm783, %v2660
      %2713 = vst.msk [vmem:[%s392 + $0x8] sm:$0xff] %vm783, %v2709
      %s2714 = smul.u32 2, %s23
      %p2715 = scmp.lt.s32.totalorder %s22, 1
      %s2716 = scalar_select %p2715, %s22, 1
      %p2717 = scmp.lt.s32.totalorder %s2714, 7
      %s2718 = scalar_select %p2717, %s2714, 7
      %s2719 = smul.addr %s2716, 8
      %s2720 = sadd.s32 %s2718, %s2719
      %s2721 = smul.addr %s2720, 8
      %s2722 = scalar_lea.vmem %s7, %s2721
      // Predicated region
      $region49: #{tpu_custom_call.1} parent=47 // pred_check
        %p2723 = pneg %p215
      $region50: #{tpu_custom_call.1} parent=47 // pred_check_branch
        %2725 = sbr.rel (%p2723) target = $region52
      $region51: #{tpu_custom_call.1} parent=47 // pred_region
        %s2726 = smul.u32 2, %s23
      $region52: #{tpu_custom_call.1} parent=47 // pred_fallthru
        _
    $region48: #{tpu_custom_call.1} parent=5 // pred_fallthru
      _
    %p2727 = scmp.le.s32.totalorder 2, %s13
    // Predicated region
    $region53: #{tpu_custom_call.1} parent=5 // pred_check
      %p2728 = pneg %p2727
    $region54: #{tpu_custom_call.1} parent=5 // pred_check_branch
      %2730 = sbr.rel (%p2728) target = $region56
    $region55: #{tpu_custom_call.1} parent=5 // pred_region
      %s2731 = ssub.s32 %s13, 2
      // Predicated region
      $region57: #{tpu_custom_call.1} parent=55 // pred_check
        %p2732 = pneg %p221
      $region58: #{tpu_custom_call.1} parent=55 // pred_check_branch
        %2734 = sbr.rel (%p2732) target = $region60
      $region59: #{tpu_custom_call.1} parent=55 // pred_region
        %s2735 = smul.u32 2, %s25
        %p2736 = scmp.lt.s32.totalorder %s24, 1
        %s2737 = scalar_select %p2736, %s24, 1
        %p2738 = scmp.lt.s32.totalorder %s2735, 7
        %s2739 = scalar_select %p2738, %s2735, 7
        %s2740 = smul.addr %s2737, 8
        %s2741 = sadd.s32 %s2739, %s2740
        %s2742 = smul.addr %s2741, 8
        %s2743 = scalar_lea.vmem %s7, %s2742
      $region60: #{tpu_custom_call.1} parent=55 // pred_fallthru
        _
    $region56: #{tpu_custom_call.1} parent=5 // pred_fallthru
      _
  $region6: #{tpu_custom_call.1} parent=0 // loop_footer
    %s17 = sadd.s32 1, %s13
  $region7: #{tpu_custom_call.1} parent=0 // loop_footer_branch
    %12 = sbr.rel target = $region3
  $region8: #{tpu_custom_call.1} parent=0 // loop_exit
    _

</llo_original>
